<compile_context>
chip_gen: v7x
topology: tpu7x:2x2x1
jax: 0.10.0
libtpu: 0.0.40
codegen_flags: <defaults>
</compile_context>

<pallas_src>
import functools

import jax
import jax.numpy as jnp
from jax import lax
from jax.experimental import pallas as pl
from jax.experimental.pallas import tpu as pltpu

_SQRT_HALF = 0.7071067811865476


def _gelu_exact(x):
    # nn.GELU() default: 0.5 * x * (1 + erf(x / sqrt(2))).  Kept exact-erf for
    # parity with PyTorch; tanh-approx (EUP tanh slot) is a possible v6e
    # micro-opt if tolerance allows.
    return 0.5 * x * (1.0 + lax.erf(x * _SQRT_HALF))


def _bn_train(h, gamma, beta, eps=1e-5):
    # Training-mode BatchNorm1d over the batch axis (biased variance), two-pass
    # form on a fully materialized f32 tile.
    mean = jnp.mean(h, axis=0, keepdims=True)
    d = h - mean
    var = jnp.mean(d * d, axis=0, keepdims=True)
    return d * lax.rsqrt(var + eps) * gamma + beta


# ----------------------------------------------------------------------------
# Stage 1: hidden producer — h = GELU(BN1(x @ W1)), each hidden tile exactly once.
# ----------------------------------------------------------------------------
def _hidden_kernel(x_ref, w1_ref, bn1_ref, h_ref):
    # mlp[0] Linear (pre-BN bias cancels under training-mode BN) -> mlp[1] BN1
    # -> mlp[2] GELU -> mlp[3] Dropout(p=0) = identity.
    h = jnp.dot(x_ref[...], w1_ref[...], preferred_element_type=jnp.float32)
    p = bn1_ref[...]
    h = _bn_train(h, p[0:1, :], p[1:2, :])
    h_ref[...] = _gelu_exact(h).astype(h_ref.dtype)


# ----------------------------------------------------------------------------
# Stage 2: output reducer — y = GELU(BN2(h @ W2) + residual(x))
# ----------------------------------------------------------------------------
def _make_out_kernel(has_proj: bool):
    def body(h_ref, w2_ref, bn2_ref, res_ref, wr_ref, o_ref, acc_ref, r_ref):
        # NOTE: program_id/num_programs only at the top level (never inside a
        # pl.when body) — data indexing is done entirely via BlockSpecs.
        k = pl.program_id(1)
        nk = pl.num_programs(1)

        @pl.when(k == 0)
        def _init():
            acc_ref[...] = jnp.zeros_like(acc_ref)
            p = bn2_ref[...]
            if has_proj:
                # residual: Linear(in, out) — computed at k==0 so the extra
                # matmul overlaps the reduction instead of lengthening the
                # finalize step.  Post-residual bias br kept (row 2 of bn2).
                r = jnp.dot(res_ref[...], wr_ref[...],
                            preferred_element_type=jnp.float32)
                r_ref[...] = r + p[2:3, :]
            else:
                # residual: Identity — this output tile's slice of x (f32),
                # delivered by the res BlockSpec (no in-kernel slicing).
                r_ref[...] = res_ref[...].astype(jnp.float32)

        # mlp[4]: Linear(hidden, out) — accumulate over hidden tiles.
        # (pre-BN bias b2 cancels under training-mode BN2.)
        acc_ref[...] += jnp.dot(h_ref[...], w2_ref[...],
                                preferred_element_type=jnp.float32)

        @pl.when(k == nk - 1)
        def _finalize():
            p = bn2_ref[...]
            y = _bn_train(acc_ref[...], p[0:1, :], p[1:2, :])
            o_ref[...] = _gelu_exact(y + r_ref[...]).astype(o_ref.dtype)

    if has_proj:
        def kernel(h_ref, w2_ref, bn2_ref, x_ref, wr_ref, o_ref, acc_ref, r_ref):
            body(h_ref, w2_ref, bn2_ref, x_ref, wr_ref, o_ref, acc_ref, r_ref)
        return kernel

    def kernel(h_ref, w2_ref, bn2_ref, xsl_ref, o_ref, acc_ref, r_ref):
        body(h_ref, w2_ref, bn2_ref, xsl_ref, None, o_ref, acc_ref, r_ref)
    return kernel


# ----------------------------------------------------------------------------
# Wrapper
# ----------------------------------------------------------------------------
def _round_up(n, m):
    return ((n + m - 1) // m) * m


def _pad2(a, rows, cols):
    return jnp.pad(a, ((0, rows - a.shape[0]), (0, cols - a.shape[1])))


def _pick_tile(dim_p, use_bf16, need_two=False):
    # 128 by default; 256 for bf16 when the padded dim divides evenly and, for
    # "parallel" axes, at least two tiles remain (v7x has 2 TensorCores).
    if use_bf16 and dim_p % 256 == 0 and (dim_p >= 512 or not need_two):
        return 256
    return 128


@functools.partial(jax.jit, static_argnames=("use_bf16",))
def residual_block(x, w1, g1, be1, w2, wr, br, g2, be2, *, use_bf16=False):
    """Forward pass of ResidualBlock.

    x: [B, F_in] f32.  w1: [F_in, F_hid], w2: [F_hid, F_out], wr: [F_in, F_out]
    or None (identity residual).  g*/be*: [1, F] BatchNorm affine params.
    Pre-BN linear biases (b1, b2) are intentionally not taken: they cancel
    exactly under training-mode BatchNorm (batch statistics)."""
    B, f_in = x.shape
    f_hid = w1.shape[1]
    f_out = w2.shape[1]
    has_proj = wr is not None
    if not has_proj:
        assert f_in == f_out, "identity residual requires in_features == out_features"

    # Lane-dense padding of every feature dim to a multiple of 128.
    f_in_p = _round_up(f_in, 128)
    f_hid_p = _round_up(f_hid, 128)
    f_out_p = _round_up(f_out, 128)

    mm_dtype = jnp.bfloat16 if use_bf16 else jnp.float32

    x_p = _pad2(x, B, f_in_p)                 # f32 copy (identity residual path)
    x_mm = x_p.astype(mm_dtype)               # matmul-operand copy
    w1_p = _pad2(w1, f_in_p, f_hid_p).astype(mm_dtype)
    w2_p = _pad2(w2, f_hid_p, f_out_p).astype(mm_dtype)

    # Pack tiny per-feature vectors into 8-row slabs (one DMA each).
    bn1_p = jnp.zeros((8, f_hid_p), jnp.float32)
    bn1_p = bn1_p.at[0, :f_hid].set(g1.reshape(-1))
    bn1_p = bn1_p.at[1, :f_hid].set(be1.reshape(-1))

    bn2_p = jnp.zeros((8, f_out_p), jnp.float32)
    bn2_p = bn2_p.at[0, :f_out].set(g2.reshape(-1))
    bn2_p = bn2_p.at[1, :f_out].set(be2.reshape(-1))
    if has_proj:
        bn2_p = bn2_p.at[2, :f_out].set(br.reshape(-1))

    vmem_limit = 48 * 1024 * 1024

    # ---- Stage 1: h = GELU(BN1(x @ W1)) — W1 streamed once, BN1/GELU once.
    th = _pick_tile(f_hid_p, use_bf16, need_two=True)
    h = pl.pallas_call(
        _hidden_kernel,
        out_shape=jax.ShapeDtypeStruct((B, f_hid_p), mm_dtype),
        grid=(f_hid_p // th,),
        in_specs=[
            pl.BlockSpec((B, f_in_p), lambda hh: (0, 0)),   # x (resident)
            pl.BlockSpec((f_in_p, th), lambda hh: (0, hh)),  # W1 column tile
            pl.BlockSpec((8, th), lambda hh: (0, hh)),       # packed BN1 params
        ],
        out_specs=pl.BlockSpec((B, th), lambda hh: (0, hh)),
        compiler_params=pltpu.CompilerParams(
            dimension_semantics=("parallel",),
            vmem_limit_bytes=vmem_limit,
        ),
    )(x_mm, w1_p, bn1_p)

    # ---- Stage 2: y = GELU(BN2(h @ W2) + residual(x)).
    tn = _pick_tile(f_out_p, use_bf16, need_two=True)   # parallel axis
    tk = _pick_tile(f_hid_p, use_bf16)                  # reduction axis

    args = [h, w2_p, bn2_p]
    in_specs = [
        pl.BlockSpec((B, tk), lambda j, k: (0, k)),      # cached activations
        pl.BlockSpec((tk, tn), lambda j, k: (k, j)),     # W2 tile
        pl.BlockSpec((8, tn), lambda j, k: (0, j)),      # packed BN2 params (+br)
    ]
    if has_proj:
        wr_p = _pad2(wr, f_in_p, f_out_p).astype(mm_dtype)
        args += [x_mm, wr_p]
        in_specs += [
            pl.BlockSpec((B, f_in_p), lambda j, k: (0, 0)),   # x (resident)
            pl.BlockSpec((f_in_p, tn), lambda j, k: (0, j)),  # Wr column tile
        ]
    else:
        # identity residual: the output tile's slice of the f32 x.
        args += [x_p]
        in_specs += [pl.BlockSpec((B, tn), lambda j, k: (0, j))]

    out_p = pl.pallas_call(
        _make_out_kernel(has_proj),
        out_shape=jax.ShapeDtypeStruct((B, f_out_p), jnp.float32),
        grid=(f_out_p // tn, f_hid_p // tk),
        in_specs=in_specs,
        out_specs=pl.BlockSpec((B, tn), lambda j, k: (0, j)),
        scratch_shapes=[pltpu.VMEM((B, tn), jnp.float32),   # acc (h @ W2)
                        pltpu.VMEM((B, tn), jnp.float32)],  # residual
        compiler_params=pltpu.CompilerParams(
            dimension_semantics=("parallel", "arbitrary"),
            vmem_limit_bytes=vmem_limit,
        ),
    )(*args)
    return out_p[:, :f_out]


# ----------------------------------------------------------------------------
# Parameter init (mirrors the PyTorch module) and pure-JAX reference.
# ----------------------------------------------------------------------------
def init_params(key, in_features, hidden_features, out_features):
    k1, _, k3, _ = jax.random.split(key, 4)

    def linear_init(k, fan_in, fan_out):
        kw, kb = jax.random.split(k)
        bound = 1.0 / (fan_in ** 0.5)
        w = jax.random.uniform(kw, (fan_in, fan_out), jnp.float32, -bound, bound)
        b = jax.random.uniform(kb, (1, fan_out), jnp.float32, -bound, bound)
        return w, b

    w1, b1 = linear_init(k1, in_features, hidden_features)          # mlp[0]
    g1 = jnp.ones((1, hidden_features), jnp.float32)                # mlp[1]
    be1 = jnp.zeros((1, hidden_features), jnp.float32)
    w2 = jnp.zeros((hidden_features, out_features), jnp.float32)    # mlp[4] (zero init)
    b2 = jnp.zeros((1, out_features), jnp.float32)
    if in_features != out_features:
        wr, br = linear_init(k3, in_features, out_features)         # residual Linear
    else:
        wr, br = None, None                                         # Identity
    g2 = jnp.ones((1, out_features), jnp.float32)                   # batch_norm
    be2 = jnp.zeros((1, out_features), jnp.float32)
    return w1, b1, g1, be1, w2, b2, wr, br, g2, be2


def reference(x, w1, b1, g1, be1, w2, b2, wr, br, g2, be2):
    """Pure-JAX reference (keeps the pre-BN biases to show they cancel)."""
    hp = lax.Precision.HIGHEST
    h = jnp.dot(x, w1, precision=hp) + b1
    h = _bn_train(h, g1, be1)
    h = _gelu_exact(h)
    y = jnp.dot(h, w2, precision=hp) + b2
    y = _bn_train(y, g2, be2)
    r = x if wr is None else jnp.dot(x, wr, precision=hp) + br
    return _gelu_exact(y + r)


if __name__ == "__main__":
    key = jax.random.PRNGKey(0)

    # --- Case 1: in_features != out_features (residual is a Linear projection).
    # Non-multiple-of-128 dims exercise the padding path; padded dims
    # (128 / 256 / 256) give multi-tile grids on both stage-2 axes.
    B, F_IN, F_HID, F_OUT = 32, 48, 160, 200
    kx, kp, kw2 = jax.random.split(key, 3)
    x = jax.random.normal(kx, (B, F_IN), jnp.float32)
    w1, b1, g1, be1, w2, b2, wr, br, g2, be2 = init_params(kp, F_IN, F_HID, F_OUT)
    # The module zero-inits mlp[-1]; substitute non-trivial "trained" weights so
    # the test exercises the full compute path (forward semantics unchanged).
    w2 = 0.1 * jax.random.normal(kw2, (F_HID, F_OUT), jnp.float32)

    out = jax.block_until_ready(residual_block(x, w1, g1, be1, w2, wr, br, g2, be2))
    ref = reference(x, w1, b1, g1, be1, w2, b2, wr, br, g2, be2)
    assert out.shape == (B, F_OUT)
    err = float(jnp.max(jnp.abs(out - ref)))
    # Tolerance covers MXU f32-pass differences vs. the HIGHEST-precision reference.
    assert jnp.allclose(out, ref, atol=2e-2, rtol=2e-2), f"f32 proj-case max abs err {err}"

    # bf16 MXU path (usable on v5e/v6e/v7x): bf16 matmul operands, f32 BN/GELU.
    out_bf16 = jax.block_until_ready(
        residual_block(x, w1, g1, be1, w2, wr, br, g2, be2, use_bf16=True)
    )
    err_b = float(jnp.max(jnp.abs(out_bf16 - ref)))
    assert jnp.allclose(out_bf16, ref, atol=8e-2, rtol=8e-2), (
        f"bf16 proj-case max abs err {err_b}"
    )

    # --- Case 2: in_features == out_features (identity residual; no Wr matmul/DMA).
    B2, F2_IN, F2_HID = 16, 64, 96
    kx2, kp2, kw22 = jax.random.split(jax.random.PRNGKey(1), 3)
    x2 = jax.random.normal(kx2, (B2, F2_IN), jnp.float32)
    w1b, b1b, g1b, be1b, w2b, b2b, wrb, brb, g2b, be2b = init_params(kp2, F2_IN, F2_HID, F2_IN)
    w2b = 0.1 * jax.random.normal(kw22, (F2_HID, F2_IN), jnp.float32)

    out2 = jax.block_until_ready(
        residual_block(x2, w1b, g1b, be1b, w2b, None, None, g2b, be2b)
    )
    ref2 = reference(x2, w1b, b1b, g1b, be1b, w2b, b2b, None, None, g2b, be2b)
    assert out2.shape == (B2, F2_IN)
    err2 = float(jnp.max(jnp.abs(out2 - ref2)))
    assert jnp.allclose(out2, ref2, atol=2e-2, rtol=2e-2), (
        f"f32 identity-case max abs err {err2}"
    )

    print("KERNEL_OK")
</pallas_src>

<mosaic_0001>
module attributes {stable_mosaic.version = 11 : i64} {
  func.func @_hidden_kernel(%arg0: i32, %arg1: memref<32x128xf32, #tpu.memory_space<vmem>>, %arg2: memref<128x128xf32, #tpu.memory_space<vmem>>, %arg3: memref<8x128xf32, #tpu.memory_space<vmem>>, %arg4: memref<32x128xf32, #tpu.memory_space<vmem>>) attributes {dimension_semantics = [#tpu.dimension_semantics<parallel>], iteration_bounds = array<i64: 2>, scalar_prefetch = 0 : i64, scratch_operands = 0 : i64, tpu.core_type = #tpu.core_type<tc>, window_params = [{pipeline_mode = #tpu.pipeline_mode<synchronous>, transform_indices = @transform_0, window_bounds = array<i64: 32, 128>}, {transform_indices = @transform_1, window_bounds = array<i64: 128, 128>}, {transform_indices = @transform_2, window_bounds = array<i64: 8, 128>}, {transform_indices = @transform_3, window_bounds = array<i64: 32, 128>}]} {
    %c0 = arith.constant 0 : index
    %c0_0 = arith.constant 0 : index
    %0 = vector.load %arg1[%c0, %c0_0] : memref<32x128xf32, #tpu.memory_space<vmem>>, vector<32x128xf32>
    %c0_1 = arith.constant 0 : index
    %c0_2 = arith.constant 0 : index
    %1 = vector.load %arg2[%c0_1, %c0_2] : memref<128x128xf32, #tpu.memory_space<vmem>>, vector<128x128xf32>
    %cst = arith.constant dense<0.000000e+00> : vector<32x128xf32>
    %2 = tpu.matmul %0, %1, %cst {dimension_numbers = #tpu.dot_dimension_numbers<[1], [0], [0], [1], [0, 0, 1, 1], [], []>} : vector<32x128xf32>, vector<128x128xf32>, vector<32x128xf32> -> vector<32x128xf32>
    %c0_3 = arith.constant 0 : index
    %c0_4 = arith.constant 0 : index
    %3 = vector.load %arg3[%c0_3, %c0_4] : memref<8x128xf32, #tpu.memory_space<vmem>>, vector<8x128xf32>
    %4 = vector.extract_strided_slice %3 {offsets = [0, 0], sizes = [1, 128], strides = [1, 1]} : vector<8x128xf32> to vector<1x128xf32>
    %5 = vector.extract_strided_slice %3 {offsets = [1, 0], sizes = [1, 128], strides = [1, 1]} : vector<8x128xf32> to vector<1x128xf32>
    %cst_5 = arith.constant dense<0.000000e+00> : vector<128xf32>
    %6 = vector.multi_reduction <add>, %2, %cst_5 [0] : vector<32x128xf32> to vector<128xf32>
    %7 = vector.shape_cast %6 : vector<128xf32> to vector<1x128xf32>
    %cst_6 = arith.constant 3.200000e+01 : f32
    %8 = vector.broadcast %cst_6 : f32 to vector<1x128xf32>
    %9 = arith.divf %7, %8 : vector<1x128xf32>
    %10 = vector.broadcast %9 : vector<1x128xf32> to vector<32x128xf32>
    %11 = arith.subf %2, %10 : vector<32x128xf32>
    %12 = arith.mulf %11, %11 : vector<32x128xf32>
    %cst_7 = arith.constant dense<0.000000e+00> : vector<128xf32>
    %13 = vector.multi_reduction <add>, %12, %cst_7 [0] : vector<32x128xf32> to vector<128xf32>
    %14 = vector.shape_cast %13 : vector<128xf32> to vector<1x128xf32>
    %cst_8 = arith.constant 3.200000e+01 : f32
    %15 = vector.broadcast %cst_8 : f32 to vector<1x128xf32>
    %16 = arith.divf %14, %15 : vector<1x128xf32>
    %cst_9 = arith.constant 9.99999974E-6 : f32
    %17 = vector.broadcast %cst_9 : f32 to vector<1x128xf32>
    %18 = arith.addf %16, %17 : vector<1x128xf32>
    %19 = math.rsqrt %18 : vector<1x128xf32>
    %20 = vector.broadcast %19 : vector<1x128xf32> to vector<32x128xf32>
    %21 = arith.mulf %11, %20 : vector<32x128xf32>
    %22 = vector.broadcast %4 : vector<1x128xf32> to vector<32x128xf32>
    %23 = arith.mulf %21, %22 : vector<32x128xf32>
    %24 = vector.broadcast %5 : vector<1x128xf32> to vector<32x128xf32>
    %25 = arith.addf %23, %24 : vector<32x128xf32>
    %cst_10 = arith.constant 5.000000e-01 : f32
    %26 = vector.broadcast %cst_10 : f32 to vector<32x128xf32>
    %27 = arith.mulf %26, %25 : vector<32x128xf32>
    %cst_11 = arith.constant 0.707106769 : f32
    %28 = vector.broadcast %cst_11 : f32 to vector<32x128xf32>
    %29 = arith.mulf %25, %28 : vector<32x128xf32>
    %30 = math.erf %29 : vector<32x128xf32>
    %cst_12 = arith.constant 1.000000e+00 : f32
    %31 = vector.broadcast %cst_12 : f32 to vector<32x128xf32>
    %32 = arith.addf %31, %30 : vector<32x128xf32>
    %33 = arith.mulf %27, %32 : vector<32x128xf32>
    %c0_13 = arith.constant 0 : index
    %c0_14 = arith.constant 0 : index
    %34 = vector.load %arg4[%c0_13, %c0_14] : memref<32x128xf32, #tpu.memory_space<vmem>>, vector<32x128xf32>
    tpu.vector_store %arg4[%c0_13, %c0_14], %33 {strides = array<i32>} : memref<32x128xf32, #tpu.memory_space<vmem>>, vector<32x128xf32>,
    return
  }
  func.func @transform_0(%arg0: i32) -> (i32, i32) {
    %c0_i32 = arith.constant 0 : i32
    %c0_i32_0 = arith.constant 0 : i32
    %c0_i32_1 = arith.constant 0 : i32
    return %c0_i32, %c0_i32_0 : i32, i32
  }
  func.func @transform_1(%arg0: i32) -> (i32, i32) {
    %c0_i32 = arith.constant 0 : i32
    %c0_i32_0 = arith.constant 0 : i32
    return %c0_i32, %arg0 : i32, i32
  }
  func.func @transform_2(%arg0: i32) -> (i32, i32) {
    %c0_i32 = arith.constant 0 : i32
    %c0_i32_0 = arith.constant 0 : i32
    return %c0_i32, %arg0 : i32, i32
  }
  func.func @transform_3(%arg0: i32) -> (i32, i32) {
    %c0_i32 = arith.constant 0 : i32
    %c0_i32_0 = arith.constant 0 : i32
    return %c0_i32, %arg0 : i32, i32
  }
}

module attributes {stable_mosaic.version = 11 : i64} {
  func.func @kernel(%arg0: i32, %arg1: i32, %arg2: memref<32x128xf32, #tpu.memory_space<vmem>>, %arg3: memref<128x128xf32, #tpu.memory_space<vmem>>, %arg4: memref<8x128xf32, #tpu.memory_space<vmem>>, %arg5: memref<32x128xf32, #tpu.memory_space<vmem>>, %arg6: memref<128x128xf32, #tpu.memory_space<vmem>>, %arg7: memref<32x128xf32, #tpu.memory_space<vmem>>, %arg8: memref<32x128xf32, #tpu.memory_space<vmem>>, %arg9: memref<32x128xf32, #tpu.memory_space<vmem>>) attributes {dimension_semantics = [#tpu.dimension_semantics<parallel>, #tpu.dimension_semantics<arbitrary>], iteration_bounds = array<i64: 2, 2>, scalar_prefetch = 0 : i64, scratch_operands = 2 : i64, tpu.core_type = #tpu.core_type<tc>, window_params = [{transform_indices = @transform_0, window_bounds = array<i64: 32, 128>}, {transform_indices = @transform_1, window_bounds = array<i64: 128, 128>}, {transform_indices = @transform_2, window_bounds = array<i64: 8, 128>}, {pipeline_mode = #tpu.pipeline_mode<synchronous>, transform_indices = @transform_3, window_bounds = array<i64: 32, 128>}, {transform_indices = @transform_4, window_bounds = array<i64: 128, 128>}, {transform_indices = @transform_5, window_bounds = array<i64: 32, 128>}]} {
    %c0_i32 = arith.constant 0 : i32
    %0 = arith.cmpi eq, %arg1, %c0_i32 : i32
    %1 = arith.extui %0 : i1 to i32
    %c0_i32_0 = arith.constant 0 : i32
    %2 = arith.cmpi ne, %1, %c0_i32_0 : i32
    scf.if %2 {
      %cst_9 = arith.constant 0.000000e+00 : f32
      %12 = vector.broadcast %cst_9 : f32 to vector<32x128xf32>
      %c0_10 = arith.constant 0 : index
      %c0_11 = arith.constant 0 : index
      %13 = vector.load %arg8[%c0_10, %c0_11] : memref<32x128xf32, #tpu.memory_space<vmem>>, vector<32x128xf32>
      tpu.vector_store %arg8[%c0_10, %c0_11], %12 {strides = array<i32>} : memref<32x128xf32, #tpu.memory_space<vmem>>, vector<32x128xf32>,
      %c0_12 = arith.constant 0 : index
      %c0_13 = arith.constant 0 : index
      %14 = vector.load %arg4[%c0_12, %c0_13] : memref<8x128xf32, #tpu.memory_space<vmem>>, vector<8x128xf32>
      %c0_14 = arith.constant 0 : index
      %c0_15 = arith.constant 0 : index
      %15 = vector.load %arg5[%c0_14, %c0_15] : memref<32x128xf32, #tpu.memory_space<vmem>>, vector<32x128xf32>
      %c0_16 = arith.constant 0 : index
      %c0_17 = arith.constant 0 : index
      %16 = vector.load %arg6[%c0_16, %c0_17] : memref<128x128xf32, #tpu.memory_space<vmem>>, vector<128x128xf32>
      %cst_18 = arith.constant dense<0.000000e+00> : vector<32x128xf32>
      %17 = tpu.matmul %15, %16, %cst_18 {dimension_numbers = #tpu.dot_dimension_numbers<[1], [0], [0], [1], [0, 0, 1, 1], [], []>} : vector<32x128xf32>, vector<128x128xf32>, vector<32x128xf32> -> vector<32x128xf32>
      %18 = vector.extract_strided_slice %14 {offsets = [2, 0], sizes = [1, 128], strides = [1, 1]} : vector<8x128xf32> to vector<1x128xf32>
      %19 = vector.broadcast %18 : vector<1x128xf32> to vector<32x128xf32>
      %20 = arith.addf %17, %19 : vector<32x128xf32>
      %c0_19 = arith.constant 0 : index
      %c0_20 = arith.constant 0 : index
      %21 = vector.load %arg9[%c0_19, %c0_20] : memref<32x128xf32, #tpu.memory_space<vmem>>, vector<32x128xf32>
      tpu.vector_store %arg9[%c0_19, %c0_20], %20 {strides = array<i32>} : memref<32x128xf32, #tpu.memory_space<vmem>>, vector<32x128xf32>,
    } else {
    }
    %c0 = arith.constant 0 : index
    %c0_1 = arith.constant 0 : index
    %3 = vector.load %arg8[%c0, %c0_1] : memref<32x128xf32, #tpu.memory_space<vmem>>, vector<32x128xf32>
    %c0_2 = arith.constant 0 : index
    %c0_3 = arith.constant 0 : index
    %4 = vector.load %arg2[%c0_2, %c0_3] : memref<32x128xf32, #tpu.memory_space<vmem>>, vector<32x128xf32>
    %c0_4 = arith.constant 0 : index
    %c0_5 = arith.constant 0 : index
    %5 = vector.load %arg3[%c0_4, %c0_5] : memref<128x128xf32, #tpu.memory_space<vmem>>, vector<128x128xf32>
    %cst = arith.constant dense<0.000000e+00> : vector<32x128xf32>
    %6 = tpu.matmul %4, %5, %cst {dimension_numbers = #tpu.dot_dimension_numbers<[1], [0], [0], [1], [0, 0, 1, 1], [], []>} : vector<32x128xf32>, vector<128x128xf32>, vector<32x128xf32> -> vector<32x128xf32>
    %7 = arith.addf %3, %6 : vector<32x128xf32>
    %c0_6 = arith.constant 0 : index
    %c0_7 = arith.constant 0 : index
    %8 = vector.load %arg8[%c0_6, %c0_7] : memref<32x128xf32, #tpu.memory_space<vmem>>, vector<32x128xf32>
    tpu.vector_store %arg8[%c0_6, %c0_7], %7 {strides = array<i32>} : memref<32x128xf32, #tpu.memory_space<vmem>>, vector<32x128xf32>,
    %c1_i32 = arith.constant 1 : i32
    %9 = arith.cmpi eq, %arg1, %c1_i32 : i32
    %10 = arith.extui %9 : i1 to i32
    %c0_i32_8 = arith.constant 0 : i32
    %11 = arith.cmpi ne, %10, %c0_i32_8 : i32
    scf.if %11 {
      %c0_9 = arith.constant 0 : index
      %c0_10 = arith.constant 0 : index
      %12 = vector.load %arg4[%c0_9, %c0_10] : memref<8x128xf32, #tpu.memory_space<vmem>>, vector<8x128xf32>
      %c0_11 = arith.constant 0 : index
      %c0_12 = arith.constant 0 : index
      %13 = vector.load %arg8[%c0_11, %c0_12] : memref<32x128xf32, #tpu.memory_space<vmem>>, vector<32x128xf32>
      %14 = vector.extract_strided_slice %12 {offsets = [0, 0], sizes = [1, 128], strides = [1, 1]} : vector<8x128xf32> to vector<1x128xf32>
      %15 = vector.extract_strided_slice %12 {offsets = [1, 0], sizes = [1, 128], strides = [1, 1]} : vector<8x128xf32> to vector<1x128xf32>
      %cst_13 = arith.constant dense<0.000000e+00> : vector<128xf32>
      %16 = vector.multi_reduction <add>, %13, %cst_13 [0] : vector<32x128xf32> to vector<128xf32>
      %17 = vector.shape_cast %16 : vector<128xf32> to vector<1x128xf32>
      %cst_14 = arith.constant 3.200000e+01 : f32
      %18 = vector.broadcast %cst_14 : f32 to vector<1x128xf32>
      %19 = arith.divf %17, %18 : vector<1x128xf32>
      %20 = vector.broadcast %19 : vector<1x128xf32> to vector<32x128xf32>
      %21 = arith.subf %13, %20 : vector<32x128xf32>
      %22 = arith.mulf %21, %21 : vector<32x128xf32>
      %cst_15 = arith.constant dense<0.000000e+00> : vector<128xf32>
      %23 = vector.multi_reduction <add>, %22, %cst_15 [0] : vector<32x128xf32> to vector<128xf32>
      %24 = vector.shape_cast %23 : vector<128xf32> to vector<1x128xf32>
      %cst_16 = arith.constant 3.200000e+01 : f32
      %25 = vector.broadcast %cst_16 : f32 to vector<1x128xf32>
      %26 = arith.divf %24, %25 : vector<1x128xf32>
      %cst_17 = arith.constant 9.99999974E-6 : f32
      %27 = vector.broadcast %cst_17 : f32 to vector<1x128xf32>
      %28 = arith.addf %26, %27 : vector<1x128xf32>
      %29 = math.rsqrt %28 : vector<1x128xf32>
      %30 = vector.broadcast %29 : vector<1x128xf32> to vector<32x128xf32>
      %31 = arith.mulf %21, %30 : vector<32x128xf32>
      %32 = vector.broadcast %14 : vector<1x128xf32> to vector<32x128xf32>
      %33 = arith.mulf %31, %32 : vector<32x128xf32>
      %34 = vector.broadcast %15 : vector<1x128xf32> to vector<32x128xf32>
      %35 = arith.addf %33, %34 : vector<32x128xf32>
      %c0_18 = arith.constant 0 : index
      %c0_19 = arith.constant 0 : index
      %36 = vector.load %arg9[%c0_18, %c0_19] : memref<32x128xf32, #tpu.memory_space<vmem>>, vector<32x128xf32>
      %37 = arith.addf %35, %36 : vector<32x128xf32>
      %cst_20 = arith.constant 5.000000e-01 : f32
      %38 = vector.broadcast %cst_20 : f32 to vector<32x128xf32>
      %39 = arith.mulf %38, %37 : vector<32x128xf32>
      %cst_21 = arith.constant 0.707106769 : f32
      %40 = vector.broadcast %cst_21 : f32 to vector<32x128xf32>
      %41 = arith.mulf %37, %40 : vector<32x128xf32>
      %42 = math.erf %41 : vector<32x128xf32>
      %cst_22 = arith.constant 1.000000e+00 : f32
      %43 = vector.broadcast %cst_22 : f32 to vector<32x128xf32>
      %44 = arith.addf %43, %42 : vector<32x128xf32>
      %45 = arith.mulf %39, %44 : vector<32x128xf32>
      %c0_23 = arith.constant 0 : index
      %c0_24 = arith.constant 0 : index
      %46 = vector.load %arg7[%c0_23, %c0_24] : memref<32x128xf32, #tpu.memory_space<vmem>>, vector<32x128xf32>
      tpu.vector_store %arg7[%c0_23, %c0_24], %45 {strides = array<i32>} : memref<32x128xf32, #tpu.memory_space<vmem>>, vector<32x128xf32>,
    } else {
    }
    return
  }
  func.func @transform_0(%arg0: i32, %arg1: i32) -> (i32, i32) {
    %c0_i32 = arith.constant 0 : i32
    %c0_i32_0 = arith.constant 0 : i32
    return %c0_i32, %arg1 : i32, i32
  }
  func.func @transform_1(%arg0: i32, %arg1: i32) -> (i32, i32) {
    %c0_i32 = arith.constant 0 : i32
    return %arg1, %arg0 : i32, i32
  }
  func.func @transform_2(%arg0: i32, %arg1: i32) -> (i32, i32) {
    %c0_i32 = arith.constant 0 : i32
    %c0_i32_0 = arith.constant 0 : i32
    return %c0_i32, %arg0 : i32, i32
  }
  func.func @transform_3(%arg0: i32, %arg1: i32) -> (i32, i32) {
    %c0_i32 = arith.constant 0 : i32
    %c0_i32_0 = arith.constant 0 : i32
    %c0_i32_1 = arith.constant 0 : i32
    return %c0_i32, %c0_i32_0 : i32, i32
  }
  func.func @transform_4(%arg0: i32, %arg1: i32) -> (i32, i32) {
    %c0_i32 = arith.constant 0 : i32
    %c0_i32_0 = arith.constant 0 : i32
    return %c0_i32, %arg0 : i32, i32
  }
  func.func @transform_5(%arg0: i32, %arg1: i32) -> (i32, i32) {
    %c0_i32 = arith.constant 0 : i32
    %c0_i32_0 = arith.constant 0 : i32
    return %c0_i32, %arg0 : i32, i32
  }
}

</mosaic_0001>

<llo_original>
// kernel: residual_block.2
$region0: #{residual_block.2}
  #allocation0 [shape = 'u32[]', space=smem, size = 0x4, offset = 0x4, fixed_abs, tag = 'smem constant byte address 0x4 - core index']
  #allocation1 [shape = 'u32[144,128]{1,0:T(1,128)}', space=vmem, size = 0x12000, scoped, tag = 'internal scratch']
  %s0 = inlined_call_operand.vmem [shape: f32[32,128], index: 0, kind: input, shape index: {}]
  %s1 = inlined_call_operand.vmem [shape: f32[128,256], index: 1, kind: input, shape index: {}]
  %s2 = inlined_call_operand.vmem [shape: f32[8,256], index: 2, kind: input, shape index: {}]
  %s3 = inlined_call_operand.vmem [shape: f32[32,256], index: 3, kind: output, shape index: {}]
  %s4 = sld [smem:[#allocation0]]
  $region117: #{residual_block.2} parent=0
    _
  %s6 = ssub.s32 1, %s4
  %s7 = scalar_select 0, %s6, %s4
  $region1: #{residual_block.2} parent=0
    #allocation2 [shape = 'u8[131072]{0}', space=vmem, size = 0x20000, scoped, tag = 'input window, operand 1']
    #allocation3 [shape = 'u8[32768]{0}', space=vmem, size = 0x8000, scoped, tag = 'output window, operand 0']
    loop: start=0, step=1, limit=4
    $region2: #{residual_block.2} parent=1 // loop_pre_header
      _
    $region3: #{residual_block.2} parent=1 // loop_header
      %s9 = sphi 0, %s13
      %p10 = scmp.ge.s32.totalorder %s9, 4
      %s17 = sphi 0, %s17
      %s19 = sphi 0, %s17
      %s20 = sphi 0, %s19
      %s34 = sphi 0, %s20
      %s40 = sphi 0, %s42
      %s43 = sphi 0, %s40
      %s44 = sphi 0, %s43
      %s60 = sphi 0, %s44
      %s66 = sphi 0, %s68
      %s69 = sphi 0, %s66
      %s70 = sphi 0, %s69
      %s86 = sphi 0, %s70
      %s92 = sphi 0, %s94
      %s95 = sphi 0, %s92
      %s96 = sphi 0, %s95
      %s112 = sphi 0, %s96
    $region4: #{residual_block.2} parent=1 // loop_header_branch
      %12 = sbr.rel (%p10) target = $region8
    $region5: #{residual_block.2} parent=1 // loop_body
      %s14 = ssub.s32 %s9, 1
      %s15 = ssub.s32 %s9, 2
      %s16 = sadd.s32 %s9, 1
      %s18 = sadd.s32 %s17, 1
      %p21 = scmp.eq.s32.totalorder %s9, 1
      %p22 = scmp.ne.s32.totalorder %s17, %s19
      %p23 = scmp.eq.s32.totalorder %s9, 0
      %p24 = por %p22, %p23
      %p25 = scmp.ne.s32.totalorder %s17, %s19
      %p26 = scmp.eq.s32.totalorder %s14, 1
      %p27 = por %p25, %p26
      %p28 = scmp.ne.s32.totalorder %s19, %s20
      %p29 = scmp.eq.s32.totalorder %s14, 0
      %p30 = por %p28, %p29
      %p31 = scmp.ne.s32.totalorder %s19, %s20
      %p32 = scmp.eq.s32.totalorder %s15, 1
      %p33 = por %p31, %p32
      %p35 = scmp.ne.s32.totalorder %s20, %s34
      %p36 = scmp.eq.s32.totalorder %s15, 0
      %p37 = por %p35, %p36
      %s38 = ssub.s32 %s9, %s16
      %p39 = scmp.eq.s32.totalorder %s38, 0
      %s41 = sadd.s32 %s40, 1
      %s42 = scalar_select %p39, %s40, %s41
      %p45 = pneg %p39
      %p46 = scmp.eq.s32.totalorder %s9, 1
      %p47 = por %p45, %p46
      %p48 = scmp.ne.s32.totalorder %s40, %s43
      %p49 = scmp.eq.s32.totalorder %s9, 0
      %p50 = por %p48, %p49
      %p51 = scmp.ne.s32.totalorder %s40, %s43
      %p52 = scmp.eq.s32.totalorder %s14, 1
      %p53 = por %p51, %p52
      %p54 = scmp.ne.s32.totalorder %s43, %s44
      %p55 = scmp.eq.s32.totalorder %s14, 0
      %p56 = por %p54, %p55
      %p57 = scmp.ne.s32.totalorder %s43, %s44
      %p58 = scmp.eq.s32.totalorder %s15, 1
      %p59 = por %p57, %p58
      %p61 = scmp.ne.s32.totalorder %s44, %s60
      %p62 = scmp.eq.s32.totalorder %s15, 0
      %p63 = por %p61, %p62
      %s64 = ssub.s32 %s9, %s16
      %p65 = scmp.eq.s32.totalorder %s64, 0
      %s67 = sadd.s32 %s66, 1
      %s68 = scalar_select %p65, %s66, %s67
      %p71 = pneg %p65
      %p72 = scmp.eq.s32.totalorder %s9, 1
      %p73 = por %p71, %p72
      %p74 = scmp.ne.s32.totalorder %s66, %s69
      %p75 = scmp.eq.s32.totalorder %s9, 0
      %p76 = por %p74, %p75
      %p77 = scmp.ne.s32.totalorder %s66, %s69
      %p78 = scmp.eq.s32.totalorder %s14, 1
      %p79 = por %p77, %p78
      %p80 = scmp.ne.s32.totalorder %s69, %s70
      %p81 = scmp.eq.s32.totalorder %s14, 0
      %p82 = por %p80, %p81
      %p83 = scmp.ne.s32.totalorder %s69, %s70
      %p84 = scmp.eq.s32.totalorder %s15, 1
      %p85 = por %p83, %p84
      %p87 = scmp.ne.s32.totalorder %s70, %s86
      %p88 = scmp.eq.s32.totalorder %s15, 0
      %p89 = por %p87, %p88
      %s90 = ssub.s32 %s9, %s16
      %p91 = scmp.eq.s32.totalorder %s90, 0
      %s93 = sadd.s32 %s92, 1
      %s94 = scalar_select %p91, %s92, %s93
      %p97 = pneg %p91
      %p98 = scmp.eq.s32.totalorder %s9, 1
      %p99 = por %p97, %p98
      %p100 = scmp.ne.s32.totalorder %s92, %s95
      %p101 = scmp.eq.s32.totalorder %s9, 0
      %p102 = por %p100, %p101
      %p103 = scmp.ne.s32.totalorder %s92, %s95
      %p104 = scmp.eq.s32.totalorder %s14, 1
      %p105 = por %p103, %p104
      %p106 = scmp.ne.s32.totalorder %s95, %s96
      %p107 = scmp.eq.s32.totalorder %s14, 0
      %p108 = por %p106, %p107
      %p109 = scmp.ne.s32.totalorder %s95, %s96
      %p110 = scmp.eq.s32.totalorder %s15, 1
      %p111 = por %p109, %p110
      %p113 = scmp.ne.s32.totalorder %s96, %s112
      %p114 = scmp.eq.s32.totalorder %s15, 0
      %p115 = por %p113, %p114
      %p116 = scmp.le.s32.totalorder 1, %s9
      %p117 = scmp.lt.s32.totalorder %s9, 3
      %p118 = pnand %p116, %p117
      %p119 = pneg %p118
      // Predicated region
      $region9: #{residual_block.2} parent=5 // pred_check
        _
      $region10: #{residual_block.2} parent=5 // pred_check_branch
        %121 = sbr.rel (%p118) target = $region12
      $region11: #{residual_block.2} parent=5 // pred_region
        %s122 = ssub.s32 %s9, 1
        // Predicated region
        $region13: #{residual_block.2} parent=11 // pred_check
          %p123 = pneg %p30
        $region14: #{residual_block.2} parent=11 // pred_check_branch
          %125 = sbr.rel (%p123) target = $region16
        $region15: #{residual_block.2} parent=11 // pred_region
          _
        $region16: #{residual_block.2} parent=11 // pred_fallthru
          _
      $region12: #{residual_block.2} parent=5 // pred_fallthru
        _
      %p126 = scmp.lt.s32.totalorder %s9, 2
      // Predicated region
      $region17: #{residual_block.2} parent=5 // pred_check
        %p127 = pneg %p126
      $region18: #{residual_block.2} parent=5 // pred_check_branch
        %129 = sbr.rel (%p127) target = $region20
      $region19: #{residual_block.2} parent=5 // pred_region
        // Predicated region
        $region21: #{residual_block.2} parent=19 // pred_check
          %p130 = pneg %p50
        $region22: #{residual_block.2} parent=19 // pred_check_branch
          %132 = sbr.rel (%p130) target = $region24
        $region23: #{residual_block.2} parent=19 // pred_region
          %s133 = sand.u32 %s40, 1
          %s134 = sand.u32 %s40, 1
          %s135 = smul.addr %s134, 128
          %s136 = scalar_lea.vmem [#allocation2], %s135
          %s137 = smul.addr %s9, 8
          %s138 = scalar_lea.vmem %s1, %s137
          // Predicated region
          $region25: #{residual_block.2} parent=23 // pred_check
            _
          $region26: #{residual_block.2} parent=23 // pred_check_branch
            %140 = sbr.rel (0) target = $region28
          $region27: #{residual_block.2} parent=23 // pred_region
            // Predicated region
            $region29: #{residual_block.2} parent=27 // pred_check
              _
            $region30: #{residual_block.2} parent=27 // pred_check_branch
              %142 = sbr.rel (0) target = $region32
            $region31: #{residual_block.2} parent=27 // pred_region
              // Predicated region
              $region44: #{residual_block.2} parent=31 // pred_check
                _
              $region45: #{residual_block.2} parent=31 // pred_check_branch
                %187 = sbr.rel (0) target = $region47
              $region46: #{residual_block.2} parent=31 // pred_region
                loop: start=0, step=1, limit=1
                $region48: #{residual_block.2} parent=46 // loop_pre_header
                  _
                $region49: #{residual_block.2} parent=46 // loop_header
                  %s189 = sphi 0, %s193
                  %p190 = scmp.ge.s32.totalorder %s189, 1
                  %s194 = sphi %s138, %s138
                  %s195 = sphi %s136, %s136
                $region50: #{residual_block.2} parent=46 // loop_header_branch
                  %192 = sbr.rel (%p190) target = $region54
                $region51: #{residual_block.2} parent=46 // loop_body
                  %v196 = vld [vmem:[%s194] sm:$0xff]
                  %197 = vst [vmem:[%s195] sm:$0xff] %v196
                  %v198 = vld [vmem:[%s194 + $0x10] sm:$0xff]
                  %199 = vst [vmem:[%s195 + $0x8] sm:$0xff] %v198
                  %v200 = vld [vmem:[%s194 + $0x20] sm:$0xff]
                  %201 = vst [vmem:[%s195 + $0x10] sm:$0xff] %v200
                  %v202 = vld [vmem:[%s194 + $0x30] sm:$0xff]
                  %203 = vst [vmem:[%s195 + $0x18] sm:$0xff] %v202
                  %v204 = vld [vmem:[%s194 + $0x40] sm:$0xff]
                  %205 = vst [vmem:[%s195 + $0x20] sm:$0xff] %v204
                  %v206 = vld [vmem:[%s194 + $0x50] sm:$0xff]
                  %207 = vst [vmem:[%s195 + $0x28] sm:$0xff] %v206
                  %v208 = vld [vmem:[%s194 + $0x60] sm:$0xff]
                  %209 = vst [vmem:[%s195 + $0x30] sm:$0xff] %v208
                  %v210 = vld [vmem:[%s194 + $0x70] sm:$0xff]
                  %211 = vst [vmem:[%s195 + $0x38] sm:$0xff] %v210
                  %v212 = vld [vmem:[%s194 + $0x80] sm:$0xff]
                  %213 = vst [vmem:[%s195 + $0x40] sm:$0xff] %v212
                  %v214 = vld [vmem:[%s194 + $0x90] sm:$0xff]
                  %215 = vst [vmem:[%s195 + $0x48] sm:$0xff] %v214
                  %v216 = vld [vmem:[%s194 + $0xa0] sm:$0xff]
                  %217 = vst [vmem:[%s195 + $0x50] sm:$0xff] %v216
                  %v218 = vld [vmem:[%s194 + $0xb0] sm:$0xff]
                  %219 = vst [vmem:[%s195 + $0x58] sm:$0xff] %v218
                  %v220 = vld [vmem:[%s194 + $0xc0] sm:$0xff]
                  %221 = vst [vmem:[%s195 + $0x60] sm:$0xff] %v220
                  %v222 = vld [vmem:[%s194 + $0xd0] sm:$0xff]
                  %223 = vst [vmem:[%s195 + $0x68] sm:$0xff] %v222
                  %v224 = vld [vmem:[%s194 + $0xe0] sm:$0xff]
                  %225 = vst [vmem:[%s195 + $0x70] sm:$0xff] %v224
                  %v226 = vld [vmem:[%s194 + $0xf0] sm:$0xff]
                  %227 = vst [vmem:[%s195 + $0x78] sm:$0xff] %v226
                $region52: #{residual_block.2} parent=46 // loop_footer
                  %s193 = sadd.s32 1, %s189
                $region53: #{residual_block.2} parent=46 // loop_footer_branch
                  %188 = sbr.rel target = $region49
                $region54: #{residual_block.2} parent=46 // loop_exit
                  _
              $region47: #{residual_block.2} parent=31 // pred_fallthru
                _
              // Predicated region
              $region55: #{residual_block.2} parent=31 // pred_check
                _
              $region56: #{residual_block.2} parent=31 // pred_check_branch
                %229 = sbr.rel target = $region58
              $region57: #{residual_block.2} parent=31 // pred_region
                _
              $region58: #{residual_block.2} parent=31 // pred_fallthru
                _
            $region32: #{residual_block.2} parent=27 // pred_fallthru
              _
            // Predicated region
            $region33: #{residual_block.2} parent=27 // pred_check
              _
            $region34: #{residual_block.2} parent=27 // pred_check_branch
              %144 = sbr.rel target = $region36
            $region35: #{residual_block.2} parent=27 // pred_region
              loop: start=0, step=1, limit=1
              $region37: #{residual_block.2} parent=35 // loop_pre_header
                _
              $region38: #{residual_block.2} parent=35 // loop_header
                %s147 = sphi 0, %s151
                %p148 = scmp.ge.s32.totalorder %s147, 1
                %s152 = sphi %s138, %s138
                %s153 = sphi %s136, %s136
              $region39: #{residual_block.2} parent=35 // loop_header_branch
                %150 = sbr.rel (%p148) target = $region43
              $region40: #{residual_block.2} parent=35 // loop_body
                %v154 = vld [vmem:[%s152] sm:$0xff]
                %155 = vst [vmem:[%s153] sm:$0xff] %v154
                %v156 = vld [vmem:[%s152 + $0x10] sm:$0xff]
                %157 = vst [vmem:[%s153 + $0x8] sm:$0xff] %v156
                %v158 = vld [vmem:[%s152 + $0x20] sm:$0xff]
                %159 = vst [vmem:[%s153 + $0x10] sm:$0xff] %v158
                %v160 = vld [vmem:[%s152 + $0x30] sm:$0xff]
                %161 = vst [vmem:[%s153 + $0x18] sm:$0xff] %v160
                %v162 = vld [vmem:[%s152 + $0x40] sm:$0xff]
                %163 = vst [vmem:[%s153 + $0x20] sm:$0xff] %v162
                %v164 = vld [vmem:[%s152 + $0x50] sm:$0xff]
                %165 = vst [vmem:[%s153 + $0x28] sm:$0xff] %v164
                %v166 = vld [vmem:[%s152 + $0x60] sm:$0xff]
                %167 = vst [vmem:[%s153 + $0x30] sm:$0xff] %v166
                %v168 = vld [vmem:[%s152 + $0x70] sm:$0xff]
                %169 = vst [vmem:[%s153 + $0x38] sm:$0xff] %v168
                %v170 = vld [vmem:[%s152 + $0x80] sm:$0xff]
                %171 = vst [vmem:[%s153 + $0x40] sm:$0xff] %v170
                %v172 = vld [vmem:[%s152 + $0x90] sm:$0xff]
                %173 = vst [vmem:[%s153 + $0x48] sm:$0xff] %v172
                %v174 = vld [vmem:[%s152 + $0xa0] sm:$0xff]
                %175 = vst [vmem:[%s153 + $0x50] sm:$0xff] %v174
                %v176 = vld [vmem:[%s152 + $0xb0] sm:$0xff]
                %177 = vst [vmem:[%s153 + $0x58] sm:$0xff] %v176
                %v178 = vld [vmem:[%s152 + $0xc0] sm:$0xff]
                %179 = vst [vmem:[%s153 + $0x60] sm:$0xff] %v178
                %v180 = vld [vmem:[%s152 + $0xd0] sm:$0xff]
                %181 = vst [vmem:[%s153 + $0x68] sm:$0xff] %v180
                %v182 = vld [vmem:[%s152 + $0xe0] sm:$0xff]
                %183 = vst [vmem:[%s153 + $0x70] sm:$0xff] %v182
                %v184 = vld [vmem:[%s152 + $0xf0] sm:$0xff]
                %185 = vst [vmem:[%s153 + $0x78] sm:$0xff] %v184
              $region41: #{residual_block.2} parent=35 // loop_footer
                %s151 = sadd.s32 1, %s147
              $region42: #{residual_block.2} parent=35 // loop_footer_branch
                %146 = sbr.rel target = $region38
              $region43: #{residual_block.2} parent=35 // loop_exit
                _
            $region36: #{residual_block.2} parent=27 // pred_fallthru
              _
          $region28: #{residual_block.2} parent=23 // pred_fallthru
            _
          %230 = vnop
        $region24: #{residual_block.2} parent=19 // pred_fallthru
          _
        // Predicated region
        $region59: #{residual_block.2} parent=19 // pred_check
          %p231 = pneg %p76
        $region60: #{residual_block.2} parent=19 // pred_check_branch
          %233 = sbr.rel (%p231) target = $region62
        $region61: #{residual_block.2} parent=19 // pred_region
          %p234 = scmp.lt.s32.totalorder %s9, 1
          %s235 = scalar_select %p234, %s9, 1
          %s236 = smul.addr %s235, 8
          %s237 = scalar_lea.vmem %s2, %s236
        $region62: #{residual_block.2} parent=19 // pred_fallthru
          _
      $region20: #{residual_block.2} parent=5 // pred_fallthru
        _
      %p238 = scmp.le.s32.totalorder 1, %s9
      %p239 = scmp.lt.s32.totalorder %s9, 3
      %p240 = pnand %p238, %p239
      %p241 = pneg %p240
      // Predicated region
      $region63: #{residual_block.2} parent=5 // pred_check
        _
      $region64: #{residual_block.2} parent=5 // pred_check_branch
        %243 = sbr.rel (%p240) target = $region66
      $region65: #{residual_block.2} parent=5 // pred_region
        %s244 = ssub.s32 %s9, 1
        %s245 = sand.u32 %s43, 1
        %s246 = sand.u32 %s43, 1
        %s247 = smul.addr %s246, 128
        %s248 = scalar_lea.vmem [#allocation2], %s247
        // Predicated region
        $region67: #{residual_block.2} parent=65 // pred_check
          %p249 = pneg %p56
        $region68: #{residual_block.2} parent=65 // pred_check_branch
          %251 = sbr.rel (%p249) target = $region70
        $region69: #{residual_block.2} parent=65 // pred_region
          _
        $region70: #{residual_block.2} parent=65 // pred_fallthru
          _
        %p252 = pneg %p30
        %p253 = pneg %p27
        %s254 = sand.u32 %s43, 1
        %s255 = sand.u32 %s43, 1
        %s256 = smul.addr %s255, 128
        %s257 = scalar_lea.vmem [#allocation2], %s256
        %p258 = pneg %p56
        %p259 = pneg %p53
        %p260 = scmp.lt.s32.totalorder %s14, 1
        %s261 = scalar_select %p260, %s14, 1
        %s262 = smul.addr %s261, 8
        %s263 = scalar_lea.vmem %s2, %s262
        %p264 = pneg %p82
        %p265 = pneg %p79
        %p266 = pneg %p108
        %p267 = pneg %p105
        %s268 = sand.u32 %s95, 1
        %s269 = sand.u32 %s95, 1
        %s270 = smul.addr %s269, 32
        %s271 = scalar_lea.vmem [#allocation3], %s270
        %p272 = scmp.lt.s32.totalorder %s14, 1
        %s273 = scalar_select %p272, %s14, 1
        %s274 = smul.addr %s273, 8
        %s275 = scalar_lea.vmem %s2, %s274
        %v276 = vld [vmem:[%s0] sm:$0xff]
        %v277 = vld [vmem:[%s0 + $0x8] sm:$0xff]
        %v278 = vld [vmem:[%s0 + $0x10] sm:$0xff]
        %v279 = vld [vmem:[%s0 + $0x18] sm:$0xff]
        %v280 = vld [vmem:[%s248] sm:$0xff]
        %v281 = vld [vmem:[%s248 + $0x8] sm:$0xff]
        %v282 = vld [vmem:[%s248 + $0x10] sm:$0xff]
        %v283 = vld [vmem:[%s248 + $0x18] sm:$0xff]
        %v284 = vld [vmem:[%s248 + $0x20] sm:$0xff]
        %v285 = vld [vmem:[%s248 + $0x28] sm:$0xff]
        %v286 = vld [vmem:[%s248 + $0x30] sm:$0xff]
        %v287 = vld [vmem:[%s248 + $0x38] sm:$0xff]
        %v288 = vld [vmem:[%s248 + $0x40] sm:$0xff]
        %v289 = vld [vmem:[%s248 + $0x48] sm:$0xff]
        %v290 = vld [vmem:[%s248 + $0x50] sm:$0xff]
        %v291 = vld [vmem:[%s248 + $0x58] sm:$0xff]
        %v292 = vld [vmem:[%s248 + $0x60] sm:$0xff]
        %v293 = vld [vmem:[%s248 + $0x68] sm:$0xff]
        %v294 = vld [vmem:[%s248 + $0x70] sm:$0xff]
        %v295 = vld [vmem:[%s248 + $0x78] sm:$0xff]
        %296 = vmatprep.subr.mxu0 0.0
        %297 = vmatpush1.msra.mxu0 %v280
        %298 = vmatprep.subr.mxu0 0.0
        %299 = vmatpush1.msra.mxu0 %v281
        %300 = vmatprep.subr.mxu0 0.0
        %301 = vmatpush1.msra.mxu0 %v282
        %302 = vmatprep.subr.mxu0 0.0
        %303 = vmatpush1.msra.mxu0 %v283
        %304 = vmatprep.subr.mxu0 0.0
        %305 = vmatpush1.msra.mxu0 %v284
        %306 = vmatprep.subr.mxu0 0.0
        %307 = vmatpush1.msra.mxu0 %v285
        %308 = vmatprep.subr.mxu0 0.0
        %309 = vmatpush1.msra.mxu0 %v286
        %310 = vmatprep.subr.mxu0 0.0
        %311 = vmatpush1.msra.mxu0 %v287
        %312 = vmatprep.subr.mxu0 0.0
        %313 = vmatpush1.msra.mxu0 %v288
        %314 = vmatprep.subr.mxu0 0.0
        %315 = vmatpush1.msra.mxu0 %v289
        %316 = vmatprep.subr.mxu0 0.0
        %317 = vmatpush1.msra.mxu0 %v290
        %318 = vmatprep.subr.mxu0 0.0
        %319 = vmatpush1.msra.mxu0 %v291
        %320 = vmatprep.subr.mxu0 0.0
        %321 = vmatpush1.msra.mxu0 %v292
        %322 = vmatprep.subr.mxu0 0.0
        %323 = vmatpush1.msra.mxu0 %v293
        %324 = vmatprep.subr.mxu0 0.0
        %325 = vmatpush1.msra.mxu0 %v294
        %326 = vmatprep.subr.mxu0 0.0
        %327 = vmatpush1.msra.mxu0 %v295
        %328 = vmatprep.subr.mxu0 0.0
        %329 = vmatpush1.msra.mxu0 0.0
        %330 = vmatprep.subr.mxu0 0.0
        %331 = vmatpush1.msra.mxu0 0.0
        %332 = vmatprep.subr.mxu0 0.0
        %333 = vmatpush1.msra.mxu0 0.0
        %334 = vmatprep.subr.mxu0 0.0
        %335 = vmatpush1.msra.mxu0 0.0
        %336 = vmatprep.subr.mxu0 0.0
        %337 = vmatpush1.msra.mxu0 0.0
        %338 = vmatprep.subr.mxu0 0.0
        %339 = vmatpush1.msra.mxu0 0.0
        %340 = vmatprep.subr.mxu0 0.0
        %341 = vmatpush1.msra.mxu0 0.0
        %342 = vmatprep.subr.mxu0 0.0
        %343 = vmatpush1.msra.mxu0 0.0
        %344 = vmatprep.subr.mxu0 0.0
        %345 = vmatpush1.msra.mxu0 0.0
        %346 = vmatprep.subr.mxu0 0.0
        %347 = vmatpush1.msra.mxu0 0.0
        %348 = vmatprep.subr.mxu0 0.0
        %349 = vmatpush1.msra.mxu0 0.0
        %350 = vmatprep.subr.mxu0 0.0
        %351 = vmatpush1.msra.mxu0 0.0
        %352 = vmatprep.subr.mxu0 0.0
        %353 = vmatpush1.msra.mxu0 0.0
        %354 = vmatprep.subr.mxu0 0.0
        %355 = vmatpush1.msra.mxu0 0.0
        %356 = vmatprep.subr.mxu0 0.0
        %357 = vmatpush1.msra.mxu0 0.0
        %358 = vmatprep.subr.mxu0 0.0
        %359 = vmatpush1.msra.mxu0 0.0
        %360 = vmatprep.mubr.f32.mxu0 0.0
        %361 = vmatmul.mubr.f32.gmra.mrb[0].mxu0 %v276
        %v362 = vpop.f32.mrb[0].mxu0
        %v363 = vadd.f32 0.0, %v362
        %v364 = vpop.f32.mrb[0].mxu0
        %365 = vmatprep.mubr.f32.mxu0 0.0
        %366 = vmatmul.mubr.f32.gmra.mrb[0].mxu0 %v277
        %v367 = vpop.f32.mrb[0].mxu0
        %v368 = vadd.f32 0.0, %v367
        %v369 = vpop.f32.mrb[0].mxu0
        %370 = vmatprep.mubr.f32.mxu0 0.0
        %371 = vmatmul.mubr.f32.gmra.mrb[0].mxu0 %v278
        %v372 = vpop.f32.mrb[0].mxu0
        %v373 = vadd.f32 0.0, %v372
        %v374 = vpop.f32.mrb[0].mxu0
        %375 = vmatprep.mubr.f32.mxu0 0.0
        %376 = vmatmul.mubr.f32.gmra.mrb[0].mxu0 %v279
        %v377 = vpop.f32.mrb[0].mxu0
        %v378 = vadd.f32 0.0, %v377
        %v379 = vpop.f32.mrb[0].mxu0
        %380 = vdwg.mxu0
        %v381 = vld [vmem:[%s275] sm:$0xff]
        %v382 = vadd.f32 %v363, %v368
        %v383 = vadd.f32 %v382, %v373
        %v384 = vadd.f32 %v383, %v378
        %v385 = vrot.slane %v384, 4
        %v386 = vadd.f32 %v384, %v385
        %v387 = vrot.slane %v386, 2
        %v388 = vadd.f32 %v386, %v387
        %v389 = vrot.slane %v388, 1
        %v390 = vadd.f32 %v388, %v389
        %v391 = vrcp.pop 32.0
        %v392 = vmul.f32 %v390, %v391
        %v393 = vsub.f32 %v363, %v392
        %v394 = vsub.f32 %v368, %v392
        %v395 = vsub.f32 %v373, %v392
        %v396 = vsub.f32 %v378, %v392
        %v397 = vmul.f32 %v393, %v393
        %v398 = vmul.f32 %v394, %v394
        %v399 = vmul.f32 %v395, %v395
        %v400 = vmul.f32 %v396, %v396
        %v401 = vadd.f32 %v397, %v398
        %v402 = vadd.f32 %v401, %v399
        %v403 = vadd.f32 %v402, %v400
        %v404 = vrot.slane %v403, 4
        %v405 = vadd.f32 %v403, %v404
        %v406 = vrot.slane %v405, 2
        %v407 = vadd.f32 %v405, %v406
        %v408 = vrot.slane %v407, 1
        %v409 = vadd.f32 %v407, %v408
        %v410 = vmul.f32 %v409, %v391
        %v411 = vadd.f32 %v410, 1e-05
        %v412 = vrsqrt.pop %v411
        %v413 = vmul.f32 %v393, %v412
        %v414 = vmul.f32 %v394, %v412
        %v415 = vmul.f32 %v395, %v412
        %v416 = vmul.f32 %v396, %v412
        %v417 = vlaneseq
        %v418 = vshrl.u32 %v417, 7
        %v419 = vsub.s32 0, %v418
        %v420 = vrot.slane %v381, %v419
        %v421 = vmul.f32 %v413, %v420
        %v422 = vmul.f32 %v414, %v420
        %v423 = vmul.f32 %v415, %v420
        %v424 = vmul.f32 %v416, %v420
        %v425 = vlaneseq
        %v426 = vshrl.u32 %v425, 7
        %v427 = vsub.s32 1, %v426
        %v428 = vrot.slane %v381, %v427
        %v429 = vadd.f32 %v421, %v428
        %v430 = vadd.f32 %v422, %v428
        %v431 = vadd.f32 %v423, %v428
        %v432 = vadd.f32 %v424, %v428
        %v433 = vmul.f32 %v429, 0.5
        %v434 = vmul.f32 %v430, 0.5
        %v435 = vmul.f32 %v431, 0.5
        %v436 = vmul.f32 %v432, 0.5
        %v437 = vmul.f32 %v429, 0.70710677
        %v438 = vmul.f32 %v430, 0.70710677
        %v439 = vmul.f32 %v431, 0.70710677
        %v440 = vmul.f32 %v432, 0.70710677
        %v441 = verf.f32.pop %v437
        %v442 = verf.f32.pop %v438
        %v443 = verf.f32.pop %v439
        %v444 = verf.f32.pop %v440
        %v445 = vadd.f32 %v441, 1.0
        %v446 = vadd.f32 %v442, 1.0
        %v447 = vadd.f32 %v443, 1.0
        %v448 = vadd.f32 %v444, 1.0
        %v449 = vmul.f32 %v433, %v445
        %v450 = vmul.f32 %v434, %v446
        %v451 = vmul.f32 %v435, %v447
        %v452 = vmul.f32 %v436, %v448
        %453 = vst [vmem:[%s271] sm:$0xff] %v449
        %454 = vst [vmem:[%s271 + $0x8] sm:$0xff] %v450
        %455 = vst [vmem:[%s271 + $0x10] sm:$0xff] %v451
        %456 = vst [vmem:[%s271 + $0x18] sm:$0xff] %v452
        %s457 = sand.u32 %s95, 1
        %s458 = sand.u32 %s95, 1
        %s459 = smul.addr %s458, 32
        %s460 = scalar_lea.vmem [#allocation3], %s459
        // Predicated region
        $region71: #{residual_block.2} parent=65 // pred_check
          %p461 = pneg %p105
        $region72: #{residual_block.2} parent=65 // pred_check_branch
          %463 = sbr.rel (%p461) target = $region74
        $region73: #{residual_block.2} parent=65 // pred_region
          %s464 = smul.addr %s14, 8
          %s465 = scalar_lea.vmem %s3, %s464
          // Predicated region
          $region75: #{residual_block.2} parent=73 // pred_check
            _
          $region76: #{residual_block.2} parent=73 // pred_check_branch
            %467 = sbr.rel (0) target = $region78
          $region77: #{residual_block.2} parent=73 // pred_region
            // Predicated region
            $region79: #{residual_block.2} parent=77 // pred_check
              _
            $region80: #{residual_block.2} parent=77 // pred_check_branch
              %469 = sbr.rel (0) target = $region82
            $region81: #{residual_block.2} parent=77 // pred_region
              // Predicated region
              $region94: #{residual_block.2} parent=81 // pred_check
                _
              $region95: #{residual_block.2} parent=81 // pred_check_branch
                %490 = sbr.rel (0) target = $region97
              $region96: #{residual_block.2} parent=81 // pred_region
                loop: start=0, step=1, limit=1
                $region98: #{residual_block.2} parent=96 // loop_pre_header
                  _
                $region99: #{residual_block.2} parent=96 // loop_header
                  %s492 = sphi 0, %s496
                  %p493 = scmp.ge.s32.totalorder %s492, 1
                  %s497 = sphi %s460, %s460
                  %s498 = sphi %s465, %s465
                $region100: #{residual_block.2} parent=96 // loop_header_branch
                  %495 = sbr.rel (%p493) target = $region104
                $region101: #{residual_block.2} parent=96 // loop_body
                  %v499 = vld [vmem:[%s497] sm:$0xff]
                  %500 = vst [vmem:[%s498] sm:$0xff] %v499
                  %v501 = vld [vmem:[%s497 + $0x8] sm:$0xff]
                  %502 = vst [vmem:[%s498 + $0x10] sm:$0xff] %v501
                  %v503 = vld [vmem:[%s497 + $0x10] sm:$0xff]
                  %504 = vst [vmem:[%s498 + $0x20] sm:$0xff] %v503
                  %v505 = vld [vmem:[%s497 + $0x18] sm:$0xff]
                  %506 = vst [vmem:[%s498 + $0x30] sm:$0xff] %v505
                $region102: #{residual_block.2} parent=96 // loop_footer
                  %s496 = sadd.s32 1, %s492
                $region103: #{residual_block.2} parent=96 // loop_footer_branch
                  %491 = sbr.rel target = $region99
                $region104: #{residual_block.2} parent=96 // loop_exit
                  _
              $region97: #{residual_block.2} parent=81 // pred_fallthru
                _
              // Predicated region
              $region105: #{residual_block.2} parent=81 // pred_check
                _
              $region106: #{residual_block.2} parent=81 // pred_check_branch
                %508 = sbr.rel target = $region108
              $region107: #{residual_block.2} parent=81 // pred_region
                _
              $region108: #{residual_block.2} parent=81 // pred_fallthru
                _
            $region82: #{residual_block.2} parent=77 // pred_fallthru
              _
            // Predicated region
            $region83: #{residual_block.2} parent=77 // pred_check
              _
            $region84: #{residual_block.2} parent=77 // pred_check_branch
              %471 = sbr.rel target = $region86
            $region85: #{residual_block.2} parent=77 // pred_region
              loop: start=0, step=1, limit=1
              $region87: #{residual_block.2} parent=85 // loop_pre_header
                _
              $region88: #{residual_block.2} parent=85 // loop_header
                %s474 = sphi 0, %s478
                %p475 = scmp.ge.s32.totalorder %s474, 1
                %s479 = sphi %s460, %s460
                %s480 = sphi %s465, %s465
              $region89: #{residual_block.2} parent=85 // loop_header_branch
                %477 = sbr.rel (%p475) target = $region93
              $region90: #{residual_block.2} parent=85 // loop_body
                %v481 = vld [vmem:[%s479] sm:$0xff]
                %482 = vst [vmem:[%s480] sm:$0xff] %v481
                %v483 = vld [vmem:[%s479 + $0x8] sm:$0xff]
                %484 = vst [vmem:[%s480 + $0x10] sm:$0xff] %v483
                %v485 = vld [vmem:[%s479 + $0x10] sm:$0xff]
                %486 = vst [vmem:[%s480 + $0x20] sm:$0xff] %v485
                %v487 = vld [vmem:[%s479 + $0x18] sm:$0xff]
                %488 = vst [vmem:[%s480 + $0x30] sm:$0xff] %v487
              $region91: #{residual_block.2} parent=85 // loop_footer
                %s478 = sadd.s32 1, %s474
              $region92: #{residual_block.2} parent=85 // loop_footer_branch
                %473 = sbr.rel target = $region88
              $region93: #{residual_block.2} parent=85 // loop_exit
                _
            $region86: #{residual_block.2} parent=77 // pred_fallthru
              _
          $region78: #{residual_block.2} parent=73 // pred_fallthru
            _
          %509 = vnop
        $region74: #{residual_block.2} parent=65 // pred_fallthru
          _
      $region66: #{residual_block.2} parent=5 // pred_fallthru
        _
      %p510 = scmp.le.s32.totalorder 2, %s9
      // Predicated region
      $region109: #{residual_block.2} parent=5 // pred_check
        %p511 = pneg %p510
      $region110: #{residual_block.2} parent=5 // pred_check_branch
        %513 = sbr.rel (%p511) target = $region112
      $region111: #{residual_block.2} parent=5 // pred_region
        %s514 = ssub.s32 %s9, 2
        // Predicated region
        $region113: #{residual_block.2} parent=111 // pred_check
          %p515 = pneg %p111
        $region114: #{residual_block.2} parent=111 // pred_check_branch
          %517 = sbr.rel (%p515) target = $region116
        $region115: #{residual_block.2} parent=111 // pred_region
          %s518 = sand.u32 %s96, 1
          %s519 = sand.u32 %s96, 1
          %s520 = smul.addr %s519, 32
          %s521 = scalar_lea.vmem [#allocation3], %s520
        $region116: #{residual_block.2} parent=111 // pred_fallthru
          _
      $region112: #{residual_block.2} parent=5 // pred_fallthru
        _
    $region6: #{residual_block.2} parent=1 // loop_footer
      %s13 = sadd.s32 1, %s9
    $region7: #{residual_block.2} parent=1 // loop_footer_branch
      %8 = sbr.rel target = $region3
    $region8: #{residual_block.2} parent=1 // loop_exit
      _

// kernel: residual_block.3
$region0: #{residual_block.3}
  #allocation0 [shape = 'u32[]', space=smem, size = 0x4, offset = 0x4, fixed_abs, tag = 'smem constant byte address 0x4 - core index']
  #allocation1 [shape = 'u32[144,128]{1,0:T(1,128)}', space=vmem, size = 0x12000, scoped, tag = 'internal scratch']
  #allocation2 [shape = 'f32[32,128]{1,0:T(8,128)}', space=vmem, size = 0x4000, scoped, tag = 'scratch operand']
  #allocation3 [shape = 'f32[32,128]{1,0:T(8,128)}', space=vmem, size = 0x4000, scoped, tag = 'scratch operand']
  %s0 = inlined_call_operand.vmem [shape: f32[32,256], index: 0, kind: input, shape index: {}]
  %s1 = inlined_call_operand.vmem [shape: f32[256,256], index: 1, kind: input, shape index: {}]
  %s2 = inlined_call_operand.vmem [shape: f32[8,256], index: 2, kind: input, shape index: {}]
  %s3 = inlined_call_operand.vmem [shape: f32[32,128], index: 3, kind: input, shape index: {}]
  %s4 = inlined_call_operand.vmem [shape: f32[128,256], index: 4, kind: input, shape index: {}]
  %s5 = inlined_call_operand.hbm [shape: f32[32,256], index: 5, kind: output, shape index: {}]
  %s6 = sld [smem:[#allocation0]]
  $region175: #{residual_block.3} parent=0
    _
  %s8 = ssub.s32 1, %s6
  %s9 = scalar_select 0, %s8, %s6
  $region1: #{residual_block.3} parent=0
    #allocation4 [shape = 'u8[32768]{0}', space=vmem, size = 0x8000, scoped, tag = 'input window, operand 0']
    #allocation5 [shape = 'u8[131072]{0}', space=vmem, size = 0x20000, scoped, tag = 'input window, operand 1']
    #allocation6 [shape = 'u8[131072]{0}', space=vmem, size = 0x20000, scoped, tag = 'input window, operand 4']
    #allocation7 [shape = 'u8[32768]{0}', space=vmem, size = 0x8000, scoped, tag = 'output window, operand 0']
    #allocation8 [shape = 's32[2]{0}', space=sflag, size = 0x8, scoped, tag = 'scoped memory for residual_block.3']
    %10 = vsyncpa [#allocation8], 0
    %s11 = scalar_lea.sflag [#allocation8], 1
    %12 = vsyncpa %s11, 0
    loop: start=0, step=1, limit=6
    $region2: #{residual_block.3} parent=1 // loop_pre_header
      _
    $region3: #{residual_block.3} parent=1 // loop_header
      %s14 = sphi 0, %s18
      %p15 = scmp.ge.s32.totalorder %s14, 6
      %s21 = sphi 0, %s33
      %s22 = sphi 0, %s29
      %s23 = sphi 0, %s21
      %s24 = sphi 0, %s22
      %s25 = sphi 0, %s23
      %s26 = sphi 0, %s24
      %s36 = sphi 0, %s38
      %s39 = sphi 0, %s36
      %s40 = sphi 0, %s39
      %s56 = sphi 0, %s40
      %s64 = sphi 0, %s66
      %s67 = sphi 0, %s64
      %s68 = sphi 0, %s67
      %s84 = sphi 0, %s68
      %s90 = sphi 0, %s92
      %s93 = sphi 0, %s90
      %s94 = sphi 0, %s93
      %s110 = sphi 0, %s94
      %s114 = sphi 0, %s114
      %s116 = sphi 0, %s114
      %s117 = sphi 0, %s116
      %s131 = sphi 0, %s117
      %s137 = sphi 0, %s139
      %s140 = sphi 0, %s137
      %s141 = sphi 0, %s140
      %s157 = sphi 0, %s141
      %s163 = sphi 0, %s165
      %s166 = sphi 0, %s163
      %s167 = sphi 0, %s166
      %s183 = sphi 0, %s167
    $region4: #{residual_block.3} parent=1 // loop_header_branch
      %17 = sbr.rel (%p15) target = $region8
    $region5: #{residual_block.3} parent=1 // loop_body
      %s19 = ssub.s32 %s14, 1
      %s20 = ssub.s32 %s14, 2
      %s27 = sadd.s32 1, %s22
      %p28 = scmp.ge.s32.totalorder %s27, 2
      %s29 = scalar_select %p28, 0, %s27
      %s30 = sadd.s32 1, %s21
      %s31 = scalar_select %p28, %s30, %s21
      %p32 = scmp.ge.s32.totalorder %s31, 2
      %s33 = scalar_select %p32, 0, %s31
      %s34 = ssub.s32 %s22, %s29
      %p35 = scmp.eq.s32.totalorder %s34, 0
      %s37 = sadd.s32 %s36, 1
      %s38 = scalar_select %p35, %s36, %s37
      %p41 = pneg %p35
      %p42 = scmp.eq.s32.totalorder %s14, 3
      %p43 = por %p41, %p42
      %p44 = scmp.ne.s32.totalorder %s36, %s39
      %p45 = scmp.eq.s32.totalorder %s14, 0
      %p46 = por %p44, %p45
      %p47 = scmp.ne.s32.totalorder %s36, %s39
      %p48 = scmp.eq.s32.totalorder %s19, 3
      %p49 = por %p47, %p48
      %p50 = scmp.ne.s32.totalorder %s39, %s40
      %p51 = scmp.eq.s32.totalorder %s19, 0
      %p52 = por %p50, %p51
      %p53 = scmp.ne.s32.totalorder %s39, %s40
      %p54 = scmp.eq.s32.totalorder %s20, 3
      %p55 = por %p53, %p54
      %p57 = scmp.ne.s32.totalorder %s40, %s56
      %p58 = scmp.eq.s32.totalorder %s20, 0
      %p59 = por %p57, %p58
      %s60 = ssub.s32 %s22, %s29
      %s61 = ssub.s32 %s21, %s33
      %s62 = sor.u32 %s60, %s61
      %p63 = scmp.eq.s32.totalorder %s62, 0
      %s65 = sadd.s32 %s64, 1
      %s66 = scalar_select %p63, %s64, %s65
      %p69 = pneg %p63
      %p70 = scmp.eq.s32.totalorder %s14, 3
      %p71 = por %p69, %p70
      %p72 = scmp.ne.s32.totalorder %s64, %s67
      %p73 = scmp.eq.s32.totalorder %s14, 0
      %p74 = por %p72, %p73
      %p75 = scmp.ne.s32.totalorder %s64, %s67
      %p76 = scmp.eq.s32.totalorder %s19, 3
      %p77 = por %p75, %p76
      %p78 = scmp.ne.s32.totalorder %s67, %s68
      %p79 = scmp.eq.s32.totalorder %s19, 0
      %p80 = por %p78, %p79
      %p81 = scmp.ne.s32.totalorder %s67, %s68
      %p82 = scmp.eq.s32.totalorder %s20, 3
      %p83 = por %p81, %p82
      %p85 = scmp.ne.s32.totalorder %s68, %s84
      %p86 = scmp.eq.s32.totalorder %s20, 0
      %p87 = por %p85, %p86
      %s88 = ssub.s32 %s21, %s33
      %p89 = scmp.eq.s32.totalorder %s88, 0
      %s91 = sadd.s32 %s90, 1
      %s92 = scalar_select %p89, %s90, %s91
      %p95 = pneg %p89
      %p96 = scmp.eq.s32.totalorder %s14, 3
      %p97 = por %p95, %p96
      %p98 = scmp.ne.s32.totalorder %s90, %s93
      %p99 = scmp.eq.s32.totalorder %s14, 0
      %p100 = por %p98, %p99
      %p101 = scmp.ne.s32.totalorder %s90, %s93
      %p102 = scmp.eq.s32.totalorder %s19, 3
      %p103 = por %p101, %p102
      %p104 = scmp.ne.s32.totalorder %s93, %s94
      %p105 = scmp.eq.s32.totalorder %s19, 0
      %p106 = por %p104, %p105
      %p107 = scmp.ne.s32.totalorder %s93, %s94
      %p108 = scmp.eq.s32.totalorder %s20, 3
      %p109 = por %p107, %p108
      %p111 = scmp.ne.s32.totalorder %s94, %s110
      %p112 = scmp.eq.s32.totalorder %s20, 0
      %p113 = por %p111, %p112
      %s115 = sadd.s32 %s114, 1
      %p118 = scmp.eq.s32.totalorder %s14, 3
      %p119 = scmp.ne.s32.totalorder %s114, %s116
      %p120 = scmp.eq.s32.totalorder %s14, 0
      %p121 = por %p119, %p120
      %p122 = scmp.ne.s32.totalorder %s114, %s116
      %p123 = scmp.eq.s32.totalorder %s19, 3
      %p124 = por %p122, %p123
      %p125 = scmp.ne.s32.totalorder %s116, %s117
      %p126 = scmp.eq.s32.totalorder %s19, 0
      %p127 = por %p125, %p126
      %p128 = scmp.ne.s32.totalorder %s116, %s117
      %p129 = scmp.eq.s32.totalorder %s20, 3
      %p130 = por %p128, %p129
      %p132 = scmp.ne.s32.totalorder %s117, %s131
      %p133 = scmp.eq.s32.totalorder %s20, 0
      %p134 = por %p132, %p133
      %s135 = ssub.s32 %s21, %s33
      %p136 = scmp.eq.s32.totalorder %s135, 0
      %s138 = sadd.s32 %s137, 1
      %s139 = scalar_select %p136, %s137, %s138
      %p142 = pneg %p136
      %p143 = scmp.eq.s32.totalorder %s14, 3
      %p144 = por %p142, %p143
      %p145 = scmp.ne.s32.totalorder %s137, %s140
      %p146 = scmp.eq.s32.totalorder %s14, 0
      %p147 = por %p145, %p146
      %p148 = scmp.ne.s32.totalorder %s137, %s140
      %p149 = scmp.eq.s32.totalorder %s19, 3
      %p150 = por %p148, %p149
      %p151 = scmp.ne.s32.totalorder %s140, %s141
      %p152 = scmp.eq.s32.totalorder %s19, 0
      %p153 = por %p151, %p152
      %p154 = scmp.ne.s32.totalorder %s140, %s141
      %p155 = scmp.eq.s32.totalorder %s20, 3
      %p156 = por %p154, %p155
      %p158 = scmp.ne.s32.totalorder %s141, %s157
      %p159 = scmp.eq.s32.totalorder %s20, 0
      %p160 = por %p158, %p159
      %s161 = ssub.s32 %s21, %s33
      %p162 = scmp.eq.s32.totalorder %s161, 0
      %s164 = sadd.s32 %s163, 1
      %s165 = scalar_select %p162, %s163, %s164
      %p168 = pneg %p162
      %p169 = scmp.eq.s32.totalorder %s14, 3
      %p170 = por %p168, %p169
      %p171 = scmp.ne.s32.totalorder %s163, %s166
      %p172 = scmp.eq.s32.totalorder %s14, 0
      %p173 = por %p171, %p172
      %p174 = scmp.ne.s32.totalorder %s163, %s166
      %p175 = scmp.eq.s32.totalorder %s19, 3
      %p176 = por %p174, %p175
      %p177 = scmp.ne.s32.totalorder %s166, %s167
      %p178 = scmp.eq.s32.totalorder %s19, 0
      %p179 = por %p177, %p178
      %p180 = scmp.ne.s32.totalorder %s166, %s167
      %p181 = scmp.eq.s32.totalorder %s20, 3
      %p182 = por %p180, %p181
      %p184 = scmp.ne.s32.totalorder %s167, %s183
      %p185 = scmp.eq.s32.totalorder %s20, 0
      %p186 = por %p184, %p185
      %p187 = scmp.le.s32.totalorder 1, %s14
      %p188 = scmp.lt.s32.totalorder %s14, 5
      %p189 = pnand %p187, %p188
      %p190 = pneg %p189
      // Predicated region
      $region9: #{residual_block.3} parent=5 // pred_check
        _
      $region10: #{residual_block.3} parent=5 // pred_check_branch
        %192 = sbr.rel (%p189) target = $region12
      $region11: #{residual_block.3} parent=5 // pred_region
        %s193 = ssub.s32 %s14, 1
        // Predicated region
        $region13: #{residual_block.3} parent=11 // pred_check
          %p194 = pneg %p127
        $region14: #{residual_block.3} parent=11 // pred_check_branch
          %196 = sbr.rel (%p194) target = $region16
        $region15: #{residual_block.3} parent=11 // pred_region
          _
        $region16: #{residual_block.3} parent=11 // pred_fallthru
          _
      $region12: #{residual_block.3} parent=5 // pred_fallthru
        _
      %p197 = scmp.lt.s32.totalorder %s14, 4
      // Predicated region
      $region17: #{residual_block.3} parent=5 // pred_check
        %p198 = pneg %p197
      $region18: #{residual_block.3} parent=5 // pred_check_branch
        %200 = sbr.rel (%p198) target = $region20
      $region19: #{residual_block.3} parent=5 // pred_region
        // Predicated region
        $region21: #{residual_block.3} parent=19 // pred_check
          %p201 = pneg %p46
        $region22: #{residual_block.3} parent=19 // pred_check_branch
          %203 = sbr.rel (%p201) target = $region24
        $region23: #{residual_block.3} parent=19 // pred_region
          %s204 = sand.u32 %s36, 1
          %s205 = sand.u32 %s36, 1
          %s206 = smul.addr %s205, 32
          %s207 = scalar_lea.vmem [#allocation4], %s206
          %s208 = smul.addr %s22, 8
          %s209 = scalar_lea.vmem %s0, %s208
          // Predicated region
          $region25: #{residual_block.3} parent=23 // pred_check
            _
          $region26: #{residual_block.3} parent=23 // pred_check_branch
            %211 = sbr.rel (0) target = $region28
          $region27: #{residual_block.3} parent=23 // pred_region
            // Predicated region
            $region29: #{residual_block.3} parent=27 // pred_check
              _
            $region30: #{residual_block.3} parent=27 // pred_check_branch
              %213 = sbr.rel (0) target = $region32
            $region31: #{residual_block.3} parent=27 // pred_region
              // Predicated region
              $region44: #{residual_block.3} parent=31 // pred_check
                _
              $region45: #{residual_block.3} parent=31 // pred_check_branch
                %234 = sbr.rel (0) target = $region47
              $region46: #{residual_block.3} parent=31 // pred_region
                loop: start=0, step=1, limit=1
                $region48: #{residual_block.3} parent=46 // loop_pre_header
                  _
                $region49: #{residual_block.3} parent=46 // loop_header
                  %s236 = sphi 0, %s240
                  %p237 = scmp.ge.s32.totalorder %s236, 1
                  %s241 = sphi %s209, %s209
                  %s242 = sphi %s207, %s207
                $region50: #{residual_block.3} parent=46 // loop_header_branch
                  %239 = sbr.rel (%p237) target = $region54
                $region51: #{residual_block.3} parent=46 // loop_body
                  %v243 = vld [vmem:[%s241] sm:$0xff]
                  %244 = vst [vmem:[%s242] sm:$0xff] %v243
                  %v245 = vld [vmem:[%s241 + $0x10] sm:$0xff]
                  %246 = vst [vmem:[%s242 + $0x8] sm:$0xff] %v245
                  %v247 = vld [vmem:[%s241 + $0x20] sm:$0xff]
                  %248 = vst [vmem:[%s242 + $0x10] sm:$0xff] %v247
                  %v249 = vld [vmem:[%s241 + $0x30] sm:$0xff]
                  %250 = vst [vmem:[%s242 + $0x18] sm:$0xff] %v249
                $region52: #{residual_block.3} parent=46 // loop_footer
                  %s240 = sadd.s32 1, %s236
                $region53: #{residual_block.3} parent=46 // loop_footer_branch
                  %235 = sbr.rel target = $region49
                $region54: #{residual_block.3} parent=46 // loop_exit
                  _
              $region47: #{residual_block.3} parent=31 // pred_fallthru
                _
              // Predicated region
              $region55: #{residual_block.3} parent=31 // pred_check
                _
              $region56: #{residual_block.3} parent=31 // pred_check_branch
                %252 = sbr.rel target = $region58
              $region57: #{residual_block.3} parent=31 // pred_region
                _
              $region58: #{residual_block.3} parent=31 // pred_fallthru
                _
            $region32: #{residual_block.3} parent=27 // pred_fallthru
              _
            // Predicated region
            $region33: #{residual_block.3} parent=27 // pred_check
              _
            $region34: #{residual_block.3} parent=27 // pred_check_branch
              %215 = sbr.rel target = $region36
            $region35: #{residual_block.3} parent=27 // pred_region
              loop: start=0, step=1, limit=1
              $region37: #{residual_block.3} parent=35 // loop_pre_header
                _
              $region38: #{residual_block.3} parent=35 // loop_header
                %s218 = sphi 0, %s222
                %p219 = scmp.ge.s32.totalorder %s218, 1
                %s223 = sphi %s209, %s209
                %s224 = sphi %s207, %s207
              $region39: #{residual_block.3} parent=35 // loop_header_branch
                %221 = sbr.rel (%p219) target = $region43
              $region40: #{residual_block.3} parent=35 // loop_body
                %v225 = vld [vmem:[%s223] sm:$0xff]
                %226 = vst [vmem:[%s224] sm:$0xff] %v225
                %v227 = vld [vmem:[%s223 + $0x10] sm:$0xff]
                %228 = vst [vmem:[%s224 + $0x8] sm:$0xff] %v227
                %v229 = vld [vmem:[%s223 + $0x20] sm:$0xff]
                %230 = vst [vmem:[%s224 + $0x10] sm:$0xff] %v229
                %v231 = vld [vmem:[%s223 + $0x30] sm:$0xff]
                %232 = vst [vmem:[%s224 + $0x18] sm:$0xff] %v231
              $region41: #{residual_block.3} parent=35 // loop_footer
                %s222 = sadd.s32 1, %s218
              $region42: #{residual_block.3} parent=35 // loop_footer_branch
                %217 = sbr.rel target = $region38
              $region43: #{residual_block.3} parent=35 // loop_exit
                _
            $region36: #{residual_block.3} parent=27 // pred_fallthru
              _
          $region28: #{residual_block.3} parent=23 // pred_fallthru
            _
          %253 = vnop
        $region24: #{residual_block.3} parent=19 // pred_fallthru
          _
        // Predicated region
        $region59: #{residual_block.3} parent=19 // pred_check
          %p254 = pneg %p74
        $region60: #{residual_block.3} parent=19 // pred_check_branch
          %256 = sbr.rel (%p254) target = $region62
        $region61: #{residual_block.3} parent=19 // pred_region
          %s257 = sand.u32 %s64, 1
          %s258 = sand.u32 %s64, 1
          %s259 = smul.addr %s258, 128
          %s260 = scalar_lea.vmem [#allocation5], %s259
          %s261 = smul.u32 16, %s22
          %s262 = smul.addr %s261, 2
          %s263 = sadd.s32 %s21, %s262
          %s264 = smul.addr %s263, 8
          %s265 = scalar_lea.vmem %s1, %s264
          // Predicated region
          $region63: #{residual_block.3} parent=61 // pred_check
            _
          $region64: #{residual_block.3} parent=61 // pred_check_branch
            %267 = sbr.rel (0) target = $region66
          $region65: #{residual_block.3} parent=61 // pred_region
            // Predicated region
            $region67: #{residual_block.3} parent=65 // pred_check
              _
            $region68: #{residual_block.3} parent=65 // pred_check_branch
              %269 = sbr.rel (0) target = $region70
            $region69: #{residual_block.3} parent=65 // pred_region
              // Predicated region
              $region82: #{residual_block.3} parent=69 // pred_check
                _
              $region83: #{residual_block.3} parent=69 // pred_check_branch
                %314 = sbr.rel (0) target = $region85
              $region84: #{residual_block.3} parent=69 // pred_region
                loop: start=0, step=1, limit=1
                $region86: #{residual_block.3} parent=84 // loop_pre_header
                  _
                $region87: #{residual_block.3} parent=84 // loop_header
                  %s316 = sphi 0, %s320
                  %p317 = scmp.ge.s32.totalorder %s316, 1
                  %s321 = sphi %s265, %s265
                  %s322 = sphi %s260, %s260
                $region88: #{residual_block.3} parent=84 // loop_header_branch
                  %319 = sbr.rel (%p317) target = $region92
                $region89: #{residual_block.3} parent=84 // loop_body
                  %v323 = vld [vmem:[%s321] sm:$0xff]
                  %324 = vst [vmem:[%s322] sm:$0xff] %v323
                  %v325 = vld [vmem:[%s321 + $0x10] sm:$0xff]
                  %326 = vst [vmem:[%s322 + $0x8] sm:$0xff] %v325
                  %v327 = vld [vmem:[%s321 + $0x20] sm:$0xff]
                  %328 = vst [vmem:[%s322 + $0x10] sm:$0xff] %v327
                  %v329 = vld [vmem:[%s321 + $0x30] sm:$0xff]
                  %330 = vst [vmem:[%s322 + $0x18] sm:$0xff] %v329
                  %v331 = vld [vmem:[%s321 + $0x40] sm:$0xff]
                  %332 = vst [vmem:[%s322 + $0x20] sm:$0xff] %v331
                  %v333 = vld [vmem:[%s321 + $0x50] sm:$0xff]
                  %334 = vst [vmem:[%s322 + $0x28] sm:$0xff] %v333
                  %v335 = vld [vmem:[%s321 + $0x60] sm:$0xff]
                  %336 = vst [vmem:[%s322 + $0x30] sm:$0xff] %v335
                  %v337 = vld [vmem:[%s321 + $0x70] sm:$0xff]
                  %338 = vst [vmem:[%s322 + $0x38] sm:$0xff] %v337
                  %v339 = vld [vmem:[%s321 + $0x80] sm:$0xff]
                  %340 = vst [vmem:[%s322 + $0x40] sm:$0xff] %v339
                  %v341 = vld [vmem:[%s321 + $0x90] sm:$0xff]
                  %342 = vst [vmem:[%s322 + $0x48] sm:$0xff] %v341
                  %v343 = vld [vmem:[%s321 + $0xa0] sm:$0xff]
                  %344 = vst [vmem:[%s322 + $0x50] sm:$0xff] %v343
                  %v345 = vld [vmem:[%s321 + $0xb0] sm:$0xff]
                  %346 = vst [vmem:[%s322 + $0x58] sm:$0xff] %v345
                  %v347 = vld [vmem:[%s321 + $0xc0] sm:$0xff]
                  %348 = vst [vmem:[%s322 + $0x60] sm:$0xff] %v347
                  %v349 = vld [vmem:[%s321 + $0xd0] sm:$0xff]
                  %350 = vst [vmem:[%s322 + $0x68] sm:$0xff] %v349
                  %v351 = vld [vmem:[%s321 + $0xe0] sm:$0xff]
                  %352 = vst [vmem:[%s322 + $0x70] sm:$0xff] %v351
                  %v353 = vld [vmem:[%s321 + $0xf0] sm:$0xff]
                  %354 = vst [vmem:[%s322 + $0x78] sm:$0xff] %v353
                $region90: #{residual_block.3} parent=84 // loop_footer
                  %s320 = sadd.s32 1, %s316
                $region91: #{residual_block.3} parent=84 // loop_footer_branch
                  %315 = sbr.rel target = $region87
                $region92: #{residual_block.3} parent=84 // loop_exit
                  _
              $region85: #{residual_block.3} parent=69 // pred_fallthru
                _
              // Predicated region
              $region93: #{residual_block.3} parent=69 // pred_check
                _
              $region94: #{residual_block.3} parent=69 // pred_check_branch
                %356 = sbr.rel target = $region96
              $region95: #{residual_block.3} parent=69 // pred_region
                _
              $region96: #{residual_block.3} parent=69 // pred_fallthru
                _
            $region70: #{residual_block.3} parent=65 // pred_fallthru
              _
            // Predicated region
            $region71: #{residual_block.3} parent=65 // pred_check
              _
            $region72: #{residual_block.3} parent=65 // pred_check_branch
              %271 = sbr.rel target = $region74
            $region73: #{residual_block.3} parent=65 // pred_region
              loop: start=0, step=1, limit=1
              $region75: #{residual_block.3} parent=73 // loop_pre_header
                _
              $region76: #{residual_block.3} parent=73 // loop_header
                %s274 = sphi 0, %s278
                %p275 = scmp.ge.s32.totalorder %s274, 1
                %s279 = sphi %s265, %s265
                %s280 = sphi %s260, %s260
              $region77: #{residual_block.3} parent=73 // loop_header_branch
                %277 = sbr.rel (%p275) target = $region81
              $region78: #{residual_block.3} parent=73 // loop_body
                %v281 = vld [vmem:[%s279] sm:$0xff]
                %282 = vst [vmem:[%s280] sm:$0xff] %v281
                %v283 = vld [vmem:[%s279 + $0x10] sm:$0xff]
                %284 = vst [vmem:[%s280 + $0x8] sm:$0xff] %v283
                %v285 = vld [vmem:[%s279 + $0x20] sm:$0xff]
                %286 = vst [vmem:[%s280 + $0x10] sm:$0xff] %v285
                %v287 = vld [vmem:[%s279 + $0x30] sm:$0xff]
                %288 = vst [vmem:[%s280 + $0x18] sm:$0xff] %v287
                %v289 = vld [vmem:[%s279 + $0x40] sm:$0xff]
                %290 = vst [vmem:[%s280 + $0x20] sm:$0xff] %v289
                %v291 = vld [vmem:[%s279 + $0x50] sm:$0xff]
                %292 = vst [vmem:[%s280 + $0x28] sm:$0xff] %v291
                %v293 = vld [vmem:[%s279 + $0x60] sm:$0xff]
                %294 = vst [vmem:[%s280 + $0x30] sm:$0xff] %v293
                %v295 = vld [vmem:[%s279 + $0x70] sm:$0xff]
                %296 = vst [vmem:[%s280 + $0x38] sm:$0xff] %v295
                %v297 = vld [vmem:[%s279 + $0x80] sm:$0xff]
                %298 = vst [vmem:[%s280 + $0x40] sm:$0xff] %v297
                %v299 = vld [vmem:[%s279 + $0x90] sm:$0xff]
                %300 = vst [vmem:[%s280 + $0x48] sm:$0xff] %v299
                %v301 = vld [vmem:[%s279 + $0xa0] sm:$0xff]
                %302 = vst [vmem:[%s280 + $0x50] sm:$0xff] %v301
                %v303 = vld [vmem:[%s279 + $0xb0] sm:$0xff]
                %304 = vst [vmem:[%s280 + $0x58] sm:$0xff] %v303
                %v305 = vld [vmem:[%s279 + $0xc0] sm:$0xff]
                %306 = vst [vmem:[%s280 + $0x60] sm:$0xff] %v305
                %v307 = vld [vmem:[%s279 + $0xd0] sm:$0xff]
                %308 = vst [vmem:[%s280 + $0x68] sm:$0xff] %v307
                %v309 = vld [vmem:[%s279 + $0xe0] sm:$0xff]
                %310 = vst [vmem:[%s280 + $0x70] sm:$0xff] %v309
                %v311 = vld [vmem:[%s279 + $0xf0] sm:$0xff]
                %312 = vst [vmem:[%s280 + $0x78] sm:$0xff] %v311
              $region79: #{residual_block.3} parent=73 // loop_footer
                %s278 = sadd.s32 1, %s274
              $region80: #{residual_block.3} parent=73 // loop_footer_branch
                %273 = sbr.rel target = $region76
              $region81: #{residual_block.3} parent=73 // loop_exit
                _
            $region74: #{residual_block.3} parent=65 // pred_fallthru
              _
          $region66: #{residual_block.3} parent=61 // pred_fallthru
            _
          %357 = vnop
        $region62: #{residual_block.3} parent=19 // pred_fallthru
          _
        // Predicated region
        $region97: #{residual_block.3} parent=19 // pred_check
          %p358 = pneg %p100
        $region98: #{residual_block.3} parent=19 // pred_check_branch
          %360 = sbr.rel (%p358) target = $region100
        $region99: #{residual_block.3} parent=19 // pred_region
          %p361 = scmp.lt.s32.totalorder %s21, 1
          %s362 = scalar_select %p361, %s21, 1
          %s363 = smul.addr %s362, 8
          %s364 = scalar_lea.vmem %s2, %s363
        $region100: #{residual_block.3} parent=19 // pred_fallthru
          _
        // Predicated region
        $region101: #{residual_block.3} parent=19 // pred_check
          %p365 = pneg %p147
        $region102: #{residual_block.3} parent=19 // pred_check_branch
          %367 = sbr.rel (%p365) target = $region104
        $region103: #{residual_block.3} parent=19 // pred_region
          %s368 = sand.u32 %s137, 1
          %s369 = sand.u32 %s137, 1
          %s370 = smul.addr %s369, 128
          %s371 = scalar_lea.vmem [#allocation6], %s370
          %s372 = smul.addr %s21, 8
          %s373 = scalar_lea.vmem %s4, %s372
          // Predicated region
          $region105: #{residual_block.3} parent=103 // pred_check
            _
          $region106: #{residual_block.3} parent=103 // pred_check_branch
            %375 = sbr.rel (0) target = $region108
          $region107: #{residual_block.3} parent=103 // pred_region
            // Predicated region
            $region109: #{residual_block.3} parent=107 // pred_check
              _
            $region110: #{residual_block.3} parent=107 // pred_check_branch
              %377 = sbr.rel (0) target = $region112
            $region111: #{residual_block.3} parent=107 // pred_region
              // Predicated region
              $region124: #{residual_block.3} parent=111 // pred_check
                _
              $region125: #{residual_block.3} parent=111 // pred_check_branch
                %422 = sbr.rel (0) target = $region127
              $region126: #{residual_block.3} parent=111 // pred_region
                loop: start=0, step=1, limit=1
                $region128: #{residual_block.3} parent=126 // loop_pre_header
                  _
                $region129: #{residual_block.3} parent=126 // loop_header
                  %s424 = sphi 0, %s428
                  %p425 = scmp.ge.s32.totalorder %s424, 1
                  %s429 = sphi %s373, %s373
                  %s430 = sphi %s371, %s371
                $region130: #{residual_block.3} parent=126 // loop_header_branch
                  %427 = sbr.rel (%p425) target = $region134
                $region131: #{residual_block.3} parent=126 // loop_body
                  %v431 = vld [vmem:[%s429] sm:$0xff]
                  %432 = vst [vmem:[%s430] sm:$0xff] %v431
                  %v433 = vld [vmem:[%s429 + $0x10] sm:$0xff]
                  %434 = vst [vmem:[%s430 + $0x8] sm:$0xff] %v433
                  %v435 = vld [vmem:[%s429 + $0x20] sm:$0xff]
                  %436 = vst [vmem:[%s430 + $0x10] sm:$0xff] %v435
                  %v437 = vld [vmem:[%s429 + $0x30] sm:$0xff]
                  %438 = vst [vmem:[%s430 + $0x18] sm:$0xff] %v437
                  %v439 = vld [vmem:[%s429 + $0x40] sm:$0xff]
                  %440 = vst [vmem:[%s430 + $0x20] sm:$0xff] %v439
                  %v441 = vld [vmem:[%s429 + $0x50] sm:$0xff]
                  %442 = vst [vmem:[%s430 + $0x28] sm:$0xff] %v441
                  %v443 = vld [vmem:[%s429 + $0x60] sm:$0xff]
                  %444 = vst [vmem:[%s430 + $0x30] sm:$0xff] %v443
                  %v445 = vld [vmem:[%s429 + $0x70] sm:$0xff]
                  %446 = vst [vmem:[%s430 + $0x38] sm:$0xff] %v445
                  %v447 = vld [vmem:[%s429 + $0x80] sm:$0xff]
                  %448 = vst [vmem:[%s430 + $0x40] sm:$0xff] %v447
                  %v449 = vld [vmem:[%s429 + $0x90] sm:$0xff]
                  %450 = vst [vmem:[%s430 + $0x48] sm:$0xff] %v449
                  %v451 = vld [vmem:[%s429 + $0xa0] sm:$0xff]
                  %452 = vst [vmem:[%s430 + $0x50] sm:$0xff] %v451
                  %v453 = vld [vmem:[%s429 + $0xb0] sm:$0xff]
                  %454 = vst [vmem:[%s430 + $0x58] sm:$0xff] %v453
                  %v455 = vld [vmem:[%s429 + $0xc0] sm:$0xff]
                  %456 = vst [vmem:[%s430 + $0x60] sm:$0xff] %v455
                  %v457 = vld [vmem:[%s429 + $0xd0] sm:$0xff]
                  %458 = vst [vmem:[%s430 + $0x68] sm:$0xff] %v457
                  %v459 = vld [vmem:[%s429 + $0xe0] sm:$0xff]
                  %460 = vst [vmem:[%s430 + $0x70] sm:$0xff] %v459
                  %v461 = vld [vmem:[%s429 + $0xf0] sm:$0xff]
                  %462 = vst [vmem:[%s430 + $0x78] sm:$0xff] %v461
                $region132: #{residual_block.3} parent=126 // loop_footer
                  %s428 = sadd.s32 1, %s424
                $region133: #{residual_block.3} parent=126 // loop_footer_branch
                  %423 = sbr.rel target = $region129
                $region134: #{residual_block.3} parent=126 // loop_exit
                  _
              $region127: #{residual_block.3} parent=111 // pred_fallthru
                _
              // Predicated region
              $region135: #{residual_block.3} parent=111 // pred_check
                _
              $region136: #{residual_block.3} parent=111 // pred_check_branch
                %464 = sbr.rel target = $region138
              $region137: #{residual_block.3} parent=111 // pred_region
                _
              $region138: #{residual_block.3} parent=111 // pred_fallthru
                _
            $region112: #{residual_block.3} parent=107 // pred_fallthru
              _
            // Predicated region
            $region113: #{residual_block.3} parent=107 // pred_check
              _
            $region114: #{residual_block.3} parent=107 // pred_check_branch
              %379 = sbr.rel target = $region116
            $region115: #{residual_block.3} parent=107 // pred_region
              loop: start=0, step=1, limit=1
              $region117: #{residual_block.3} parent=115 // loop_pre_header
                _
              $region118: #{residual_block.3} parent=115 // loop_header
                %s382 = sphi 0, %s386
                %p383 = scmp.ge.s32.totalorder %s382, 1
                %s387 = sphi %s373, %s373
                %s388 = sphi %s371, %s371
              $region119: #{residual_block.3} parent=115 // loop_header_branch
                %385 = sbr.rel (%p383) target = $region123
              $region120: #{residual_block.3} parent=115 // loop_body
                %v389 = vld [vmem:[%s387] sm:$0xff]
                %390 = vst [vmem:[%s388] sm:$0xff] %v389
                %v391 = vld [vmem:[%s387 + $0x10] sm:$0xff]
                %392 = vst [vmem:[%s388 + $0x8] sm:$0xff] %v391
                %v393 = vld [vmem:[%s387 + $0x20] sm:$0xff]
                %394 = vst [vmem:[%s388 + $0x10] sm:$0xff] %v393
                %v395 = vld [vmem:[%s387 + $0x30] sm:$0xff]
                %396 = vst [vmem:[%s388 + $0x18] sm:$0xff] %v395
                %v397 = vld [vmem:[%s387 + $0x40] sm:$0xff]
                %398 = vst [vmem:[%s388 + $0x20] sm:$0xff] %v397
                %v399 = vld [vmem:[%s387 + $0x50] sm:$0xff]
                %400 = vst [vmem:[%s388 + $0x28] sm:$0xff] %v399
                %v401 = vld [vmem:[%s387 + $0x60] sm:$0xff]
                %402 = vst [vmem:[%s388 + $0x30] sm:$0xff] %v401
                %v403 = vld [vmem:[%s387 + $0x70] sm:$0xff]
                %404 = vst [vmem:[%s388 + $0x38] sm:$0xff] %v403
                %v405 = vld [vmem:[%s387 + $0x80] sm:$0xff]
                %406 = vst [vmem:[%s388 + $0x40] sm:$0xff] %v405
                %v407 = vld [vmem:[%s387 + $0x90] sm:$0xff]
                %408 = vst [vmem:[%s388 + $0x48] sm:$0xff] %v407
                %v409 = vld [vmem:[%s387 + $0xa0] sm:$0xff]
                %410 = vst [vmem:[%s388 + $0x50] sm:$0xff] %v409
                %v411 = vld [vmem:[%s387 + $0xb0] sm:$0xff]
                %412 = vst [vmem:[%s388 + $0x58] sm:$0xff] %v411
                %v413 = vld [vmem:[%s387 + $0xc0] sm:$0xff]
                %414 = vst [vmem:[%s388 + $0x60] sm:$0xff] %v413
                %v415 = vld [vmem:[%s387 + $0xd0] sm:$0xff]
                %416 = vst [vmem:[%s388 + $0x68] sm:$0xff] %v415
                %v417 = vld [vmem:[%s387 + $0xe0] sm:$0xff]
                %418 = vst [vmem:[%s388 + $0x70] sm:$0xff] %v417
                %v419 = vld [vmem:[%s387 + $0xf0] sm:$0xff]
                %420 = vst [vmem:[%s388 + $0x78] sm:$0xff] %v419
              $region121: #{residual_block.3} parent=115 // loop_footer
                %s386 = sadd.s32 1, %s382
              $region122: #{residual_block.3} parent=115 // loop_footer_branch
                %381 = sbr.rel target = $region118
              $region123: #{residual_block.3} parent=115 // loop_exit
                _
            $region116: #{residual_block.3} parent=107 // pred_fallthru
              _
          $region108: #{residual_block.3} parent=103 // pred_fallthru
            _
          %465 = vnop
        $region104: #{residual_block.3} parent=19 // pred_fallthru
          _
      $region20: #{residual_block.3} parent=5 // pred_fallthru
        _
      %p466 = scmp.le.s32.totalorder 1, %s14
      %p467 = scmp.lt.s32.totalorder %s14, 5
      %p468 = pnand %p466, %p467
      %p469 = pneg %p468
      // Predicated region
      $region139: #{residual_block.3} parent=5 // pred_check
        _
      $region140: #{residual_block.3} parent=5 // pred_check_branch
        %471 = sbr.rel (%p468) target = $region142
      $region141: #{residual_block.3} parent=5 // pred_region
        %s472 = ssub.s32 %s14, 1
        %s473 = sand.u32 %s39, 1
        %s474 = sand.u32 %s39, 1
        %s475 = smul.addr %s474, 32
        %s476 = scalar_lea.vmem [#allocation4], %s475
        // Predicated region
        $region143: #{residual_block.3} parent=141 // pred_check
          %p477 = pneg %p52
        $region144: #{residual_block.3} parent=141 // pred_check_branch
          %479 = sbr.rel (%p477) target = $region146
        $region145: #{residual_block.3} parent=141 // pred_region
          _
        $region146: #{residual_block.3} parent=141 // pred_fallthru
          _
        %s480 = sand.u32 %s67, 1
        %s481 = sand.u32 %s67, 1
        %s482 = smul.addr %s481, 128
        %s483 = scalar_lea.vmem [#allocation5], %s482
        // Predicated region
        $region147: #{residual_block.3} parent=141 // pred_check
          %p484 = pneg %p80
        $region148: #{residual_block.3} parent=141 // pred_check_branch
          %486 = sbr.rel (%p484) target = $region150
        $region149: #{residual_block.3} parent=141 // pred_region
          _
        $region150: #{residual_block.3} parent=141 // pred_fallthru
          _
        %s487 = sand.u32 %s140, 1
        %s488 = sand.u32 %s140, 1
        %s489 = smul.addr %s488, 128
        %s490 = scalar_lea.vmem [#allocation6], %s489
        // Predicated region
        $region151: #{residual_block.3} parent=141 // pred_check
          %p491 = pneg %p153
        $region152: #{residual_block.3} parent=141 // pred_check_branch
          %493 = sbr.rel (%p491) target = $region154
        $region153: #{residual_block.3} parent=141 // pred_region
          _
        $region154: #{residual_block.3} parent=141 // pred_fallthru
          _
        %s494 = sand.u32 %s39, 1
        %s495 = sand.u32 %s39, 1
        %s496 = smul.addr %s495, 32
        %s497 = scalar_lea.vmem [#allocation4], %s496
        %p498 = pneg %p52
        %p499 = pneg %p49
        %s500 = sand.u32 %s67, 1
        %s501 = sand.u32 %s67, 1
        %s502 = smul.addr %s501, 128
        %s503 = scalar_lea.vmem [#allocation5], %s502
        %p504 = pneg %p80
        %p505 = pneg %p77
        %p506 = scmp.lt.s32.totalorder %s23, 1
        %s507 = scalar_select %p506, %s23, 1
        %s508 = smul.addr %s507, 8
        %s509 = scalar_lea.vmem %s2, %s508
        %p510 = pneg %p106
        %p511 = pneg %p103
        %p512 = pneg %p127
        %p513 = pneg %p124
        %s514 = sand.u32 %s140, 1
        %s515 = sand.u32 %s140, 1
        %s516 = smul.addr %s515, 128
        %s517 = scalar_lea.vmem [#allocation6], %s516
        %p518 = pneg %p153
        %p519 = pneg %p150
        %p520 = pneg %p179
        %p521 = pneg %p176
        %s522 = sand.u32 %s166, 1
        %s523 = scalar_lea.sflag [#allocation8], %s522
        %s524 = sand.u32 %s166, 1
        %s525 = smul.addr %s524, 32
        %s526 = scalar_lea.vmem [#allocation7], %s525
        %s527 = smul.u32 16, %s24
        %p528 = scmp.lt.s32.totalorder %s23, 1
        %s529 = scalar_select %p528, %s23, 1
        %s530 = smul.addr %s529, 8
        %s531 = scalar_lea.vmem %s2, %s530
        %p532 = scmp.eq.s32.totalorder %s24, 0
        // Predicated region
        $region155: #{residual_block.3} parent=141 // pred_check
          %p533 = pneg %p532
        $region156: #{residual_block.3} parent=141 // pred_check_branch
          %535 = sbr.rel (%p533) target = $region158
        $region157: #{residual_block.3} parent=141 // pred_region
          %536 = vst [vmem:[#allocation2] sm:$0xff] 0.0
          %537 = vst [vmem:[#allocation2 + $0x8] sm:$0xff] 0.0
          %538 = vst [vmem:[#allocation2 + $0x10] sm:$0xff] 0.0
          %539 = vst [vmem:[#allocation2 + $0x18] sm:$0xff] 0.0
          %v540 = vld [vmem:[%s531] sm:$0xff]
          %v541 = vld [vmem:[%s3] sm:$0xff]
          %v542 = vld [vmem:[%s3 + $0x8] sm:$0xff]
          %v543 = vld [vmem:[%s3 + $0x10] sm:$0xff]
          %v544 = vld [vmem:[%s3 + $0x18] sm:$0xff]
          %v545 = vld [vmem:[%s490] sm:$0xff]
          %v546 = vld [vmem:[%s490 + $0x8] sm:$0xff]
          %v547 = vld [vmem:[%s490 + $0x10] sm:$0xff]
          %v548 = vld [vmem:[%s490 + $0x18] sm:$0xff]
          %v549 = vld [vmem:[%s490 + $0x20] sm:$0xff]
          %v550 = vld [vmem:[%s490 + $0x28] sm:$0xff]
          %v551 = vld [vmem:[%s490 + $0x30] sm:$0xff]
          %v552 = vld [vmem:[%s490 + $0x38] sm:$0xff]
          %v553 = vld [vmem:[%s490 + $0x40] sm:$0xff]
          %v554 = vld [vmem:[%s490 + $0x48] sm:$0xff]
          %v555 = vld [vmem:[%s490 + $0x50] sm:$0xff]
          %v556 = vld [vmem:[%s490 + $0x58] sm:$0xff]
          %v557 = vld [vmem:[%s490 + $0x60] sm:$0xff]
          %v558 = vld [vmem:[%s490 + $0x68] sm:$0xff]
          %v559 = vld [vmem:[%s490 + $0x70] sm:$0xff]
          %v560 = vld [vmem:[%s490 + $0x78] sm:$0xff]
          %v561 = vlaneseq
          %v562 = vshrl.u32 %v561, 7
          %v563 = vsub.s32 2, %v562
          %v564 = vrot.slane %v540, %v563
          %565 = vmatprep.subr.mxu0 0.0
          %566 = vmatpush1.msra.mxu0 %v545
          %567 = vmatprep.subr.mxu0 0.0
          %568 = vmatpush1.msra.mxu0 %v546
          %569 = vmatprep.subr.mxu0 0.0
          %570 = vmatpush1.msra.mxu0 %v547
          %571 = vmatprep.subr.mxu0 0.0
          %572 = vmatpush1.msra.mxu0 %v548
          %573 = vmatprep.subr.mxu0 0.0
          %574 = vmatpush1.msra.mxu0 %v549
          %575 = vmatprep.subr.mxu0 0.0
          %576 = vmatpush1.msra.mxu0 %v550
          %577 = vmatprep.subr.mxu0 0.0
          %578 = vmatpush1.msra.mxu0 %v551
          %579 = vmatprep.subr.mxu0 0.0
          %580 = vmatpush1.msra.mxu0 %v552
          %581 = vmatprep.subr.mxu0 0.0
          %582 = vmatpush1.msra.mxu0 %v553
          %583 = vmatprep.subr.mxu0 0.0
          %584 = vmatpush1.msra.mxu0 %v554
          %585 = vmatprep.subr.mxu0 0.0
          %586 = vmatpush1.msra.mxu0 %v555
          %587 = vmatprep.subr.mxu0 0.0
          %588 = vmatpush1.msra.mxu0 %v556
          %589 = vmatprep.subr.mxu0 0.0
          %590 = vmatpush1.msra.mxu0 %v557
          %591 = vmatprep.subr.mxu0 0.0
          %592 = vmatpush1.msra.mxu0 %v558
          %593 = vmatprep.subr.mxu0 0.0
          %594 = vmatpush1.msra.mxu0 %v559
          %595 = vmatprep.subr.mxu0 0.0
          %596 = vmatpush1.msra.mxu0 %v560
          %597 = vmatprep.subr.mxu0 0.0
          %598 = vmatpush1.msra.mxu0 0.0
          %599 = vmatprep.subr.mxu0 0.0
          %600 = vmatpush1.msra.mxu0 0.0
          %601 = vmatprep.subr.mxu0 0.0
          %602 = vmatpush1.msra.mxu0 0.0
          %603 = vmatprep.subr.mxu0 0.0
          %604 = vmatpush1.msra.mxu0 0.0
          %605 = vmatprep.subr.mxu0 0.0
          %606 = vmatpush1.msra.mxu0 0.0
          %607 = vmatprep.subr.mxu0 0.0
          %608 = vmatpush1.msra.mxu0 0.0
          %609 = vmatprep.subr.mxu0 0.0
          %610 = vmatpush1.msra.mxu0 0.0
          %611 = vmatprep.subr.mxu0 0.0
          %612 = vmatpush1.msra.mxu0 0.0
          %613 = vmatprep.subr.mxu0 0.0
          %614 = vmatpush1.msra.mxu0 0.0
          %615 = vmatprep.subr.mxu0 0.0
          %616 = vmatpush1.msra.mxu0 0.0
          %617 = vmatprep.subr.mxu0 0.0
          %618 = vmatpush1.msra.mxu0 0.0
          %619 = vmatprep.subr.mxu0 0.0
          %620 = vmatpush1.msra.mxu0 0.0
          %621 = vmatprep.subr.mxu0 0.0
          %622 = vmatpush1.msra.mxu0 0.0
          %623 = vmatprep.subr.mxu0 0.0
          %624 = vmatpush1.msra.mxu0 0.0
          %625 = vmatprep.subr.mxu0 0.0
          %626 = vmatpush1.msra.mxu0 0.0
          %627 = vmatprep.subr.mxu0 0.0
          %628 = vmatpush1.msra.mxu0 0.0
          %629 = vmatprep.mubr.f32.mxu0 0.0
          %630 = vmatmul.mubr.f32.gmra.mrb[0].mxu0 %v541
          %v631 = vpop.f32.mrb[0].mxu0
          %v632 = vadd.f32 %v564, %v631
          %v633 = vpop.f32.mrb[0].mxu0
          %634 = vmatprep.mubr.f32.mxu0 0.0
          %635 = vmatmul.mubr.f32.gmra.mrb[0].mxu0 %v542
          %v636 = vpop.f32.mrb[0].mxu0
          %v637 = vadd.f32 %v564, %v636
          %v638 = vpop.f32.mrb[0].mxu0
          %639 = vmatprep.mubr.f32.mxu0 0.0
          %640 = vmatmul.mubr.f32.gmra.mrb[0].mxu0 %v543
          %v641 = vpop.f32.mrb[0].mxu0
          %v642 = vadd.f32 %v564, %v641
          %v643 = vpop.f32.mrb[0].mxu0
          %644 = vmatprep.mubr.f32.mxu0 0.0
          %645 = vmatmul.mubr.f32.gmra.mrb[0].mxu0 %v544
          %v646 = vpop.f32.mrb[0].mxu0
          %v647 = vadd.f32 %v564, %v646
          %v648 = vpop.f32.mrb[0].mxu0
          %649 = vdwg.mxu0
          %650 = vst [vmem:[#allocation3] sm:$0xff] %v632
          %651 = vst [vmem:[#allocation3 + $0x8] sm:$0xff] %v637
          %652 = vst [vmem:[#allocation3 + $0x10] sm:$0xff] %v642
          %653 = vst [vmem:[#allocation3 + $0x18] sm:$0xff] %v647
        $region158: #{residual_block.3} parent=141 // pred_fallthru
          _
        %v654 = vld [vmem:[#allocation2] sm:$0xff]
        %v655 = vld [vmem:[#allocation2 + $0x8] sm:$0xff]
        %v656 = vld [vmem:[#allocation2 + $0x10] sm:$0xff]
        %v657 = vld [vmem:[#allocation2 + $0x18] sm:$0xff]
        %v658 = vld [vmem:[%s476] sm:$0xff]
        %v659 = vld [vmem:[%s476 + $0x8] sm:$0xff]
        %v660 = vld [vmem:[%s476 + $0x10] sm:$0xff]
        %v661 = vld [vmem:[%s476 + $0x18] sm:$0xff]
        %v662 = vld [vmem:[%s483] sm:$0xff]
        %v663 = vld [vmem:[%s483 + $0x8] sm:$0xff]
        %v664 = vld [vmem:[%s483 + $0x10] sm:$0xff]
        %v665 = vld [vmem:[%s483 + $0x18] sm:$0xff]
        %v666 = vld [vmem:[%s483 + $0x20] sm:$0xff]
        %v667 = vld [vmem:[%s483 + $0x28] sm:$0xff]
        %v668 = vld [vmem:[%s483 + $0x30] sm:$0xff]
        %v669 = vld [vmem:[%s483 + $0x38] sm:$0xff]
        %v670 = vld [vmem:[%s483 + $0x40] sm:$0xff]
        %v671 = vld [vmem:[%s483 + $0x48] sm:$0xff]
        %v672 = vld [vmem:[%s483 + $0x50] sm:$0xff]
        %v673 = vld [vmem:[%s483 + $0x58] sm:$0xff]
        %v674 = vld [vmem:[%s483 + $0x60] sm:$0xff]
        %v675 = vld [vmem:[%s483 + $0x68] sm:$0xff]
        %v676 = vld [vmem:[%s483 + $0x70] sm:$0xff]
        %v677 = vld [vmem:[%s483 + $0x78] sm:$0xff]
        %678 = vmatprep.subr.mxu0 0.0
        %679 = vmatpush1.msra.mxu0 %v662
        %680 = vmatprep.subr.mxu0 0.0
        %681 = vmatpush1.msra.mxu0 %v663
        %682 = vmatprep.subr.mxu0 0.0
        %683 = vmatpush1.msra.mxu0 %v664
        %684 = vmatprep.subr.mxu0 0.0
        %685 = vmatpush1.msra.mxu0 %v665
        %686 = vmatprep.subr.mxu0 0.0
        %687 = vmatpush1.msra.mxu0 %v666
        %688 = vmatprep.subr.mxu0 0.0
        %689 = vmatpush1.msra.mxu0 %v667
        %690 = vmatprep.subr.mxu0 0.0
        %691 = vmatpush1.msra.mxu0 %v668
        %692 = vmatprep.subr.mxu0 0.0
        %693 = vmatpush1.msra.mxu0 %v669
        %694 = vmatprep.subr.mxu0 0.0
        %695 = vmatpush1.msra.mxu0 %v670
        %696 = vmatprep.subr.mxu0 0.0
        %697 = vmatpush1.msra.mxu0 %v671
        %698 = vmatprep.subr.mxu0 0.0
        %699 = vmatpush1.msra.mxu0 %v672
        %700 = vmatprep.subr.mxu0 0.0
        %701 = vmatpush1.msra.mxu0 %v673
        %702 = vmatprep.subr.mxu0 0.0
        %703 = vmatpush1.msra.mxu0 %v674
        %704 = vmatprep.subr.mxu0 0.0
        %705 = vmatpush1.msra.mxu0 %v675
        %706 = vmatprep.subr.mxu0 0.0
        %707 = vmatpush1.msra.mxu0 %v676
        %708 = vmatprep.subr.mxu0 0.0
        %709 = vmatpush1.msra.mxu0 %v677
        %710 = vmatprep.subr.mxu0 0.0
        %711 = vmatpush1.msra.mxu0 0.0
        %712 = vmatprep.subr.mxu0 0.0
        %713 = vmatpush1.msra.mxu0 0.0
        %714 = vmatprep.subr.mxu0 0.0
        %715 = vmatpush1.msra.mxu0 0.0
        %716 = vmatprep.subr.mxu0 0.0
        %717 = vmatpush1.msra.mxu0 0.0
        %718 = vmatprep.subr.mxu0 0.0
        %719 = vmatpush1.msra.mxu0 0.0
        %720 = vmatprep.subr.mxu0 0.0
        %721 = vmatpush1.msra.mxu0 0.0
        %722 = vmatprep.subr.mxu0 0.0
        %723 = vmatpush1.msra.mxu0 0.0
        %724 = vmatprep.subr.mxu0 0.0
        %725 = vmatpush1.msra.mxu0 0.0
        %726 = vmatprep.subr.mxu0 0.0
        %727 = vmatpush1.msra.mxu0 0.0
        %728 = vmatprep.subr.mxu0 0.0
        %729 = vmatpush1.msra.mxu0 0.0
        %730 = vmatprep.subr.mxu0 0.0
        %731 = vmatpush1.msra.mxu0 0.0
        %732 = vmatprep.subr.mxu0 0.0
        %733 = vmatpush1.msra.mxu0 0.0
        %734 = vmatprep.subr.mxu0 0.0
        %735 = vmatpush1.msra.mxu0 0.0
        %736 = vmatprep.subr.mxu0 0.0
        %737 = vmatpush1.msra.mxu0 0.0
        %738 = vmatprep.subr.mxu0 0.0
        %739 = vmatpush1.msra.mxu0 0.0
        %740 = vmatprep.subr.mxu0 0.0
        %741 = vmatpush1.msra.mxu0 0.0
        %742 = vmatprep.mubr.f32.mxu0 0.0
        %743 = vmatmul.mubr.f32.gmra.mrb[0].mxu0 %v658
        %v744 = vpop.f32.mrb[0].mxu0
        %v745 = vadd.f32 0.0, %v744
        %v746 = vpop.f32.mrb[0].mxu0
        %747 = vmatprep.mubr.f32.mxu0 0.0
        %748 = vmatmul.mubr.f32.gmra.mrb[0].mxu0 %v659
        %v749 = vpop.f32.mrb[0].mxu0
        %v750 = vadd.f32 0.0, %v749
        %v751 = vpop.f32.mrb[0].mxu0
        %752 = vmatprep.mubr.f32.mxu0 0.0
        %753 = vmatmul.mubr.f32.gmra.mrb[0].mxu0 %v660
        %v754 = vpop.f32.mrb[0].mxu0
        %v755 = vadd.f32 0.0, %v754
        %v756 = vpop.f32.mrb[0].mxu0
        %757 = vmatprep.mubr.f32.mxu0 0.0
        %758 = vmatmul.mubr.f32.gmra.mrb[0].mxu0 %v661
        %v759 = vpop.f32.mrb[0].mxu0
        %v760 = vadd.f32 0.0, %v759
        %v761 = vpop.f32.mrb[0].mxu0
        %762 = vdwg.mxu0
        %v763 = vadd.f32 %v654, %v745
        %v764 = vadd.f32 %v655, %v750
        %v765 = vadd.f32 %v656, %v755
        %v766 = vadd.f32 %v657, %v760
        %767 = vst [vmem:[#allocation2] sm:$0xff] %v763
        %768 = vst [vmem:[#allocation2 + $0x8] sm:$0xff] %v764
        %769 = vst [vmem:[#allocation2 + $0x10] sm:$0xff] %v765
        %770 = vst [vmem:[#allocation2 + $0x18] sm:$0xff] %v766
        %p771 = scmp.eq.s32.totalorder %s24, 1
        // Predicated region
        $region159: #{residual_block.3} parent=141 // pred_check
          %p772 = pneg %p771
        $region160: #{residual_block.3} parent=141 // pred_check_branch
          %774 = sbr.rel (%p772) target = $region162
        $region161: #{residual_block.3} parent=141 // pred_region
          %v775 = vld [vmem:[%s531] sm:$0xff]
          %v776 = vld [vmem:[#allocation2] sm:$0xff]
          %v777 = vld [vmem:[#allocation2 + $0x8] sm:$0xff]
          %v778 = vld [vmem:[#allocation2 + $0x10] sm:$0xff]
          %v779 = vld [vmem:[#allocation2 + $0x18] sm:$0xff]
          %v780 = vadd.f32 %v776, %v777
          %v781 = vadd.f32 %v780, %v778
          %v782 = vadd.f32 %v781, %v779
          %v783 = vrot.slane %v782, 4
          %v784 = vadd.f32 %v782, %v783
          %v785 = vrot.slane %v784, 2
          %v786 = vadd.f32 %v784, %v785
          %v787 = vrot.slane %v786, 1
          %v788 = vadd.f32 %v786, %v787
          %v789 = vrcp.pop 32.0
          %v790 = vmul.f32 %v788, %v789
          %v791 = vsub.f32 %v776, %v790
          %v792 = vsub.f32 %v777, %v790
          %v793 = vsub.f32 %v778, %v790
          %v794 = vsub.f32 %v779, %v790
          %v795 = vmul.f32 %v791, %v791
          %v796 = vmul.f32 %v792, %v792
          %v797 = vmul.f32 %v793, %v793
          %v798 = vmul.f32 %v794, %v794
          %v799 = vadd.f32 %v795, %v796
          %v800 = vadd.f32 %v799, %v797
          %v801 = vadd.f32 %v800, %v798
          %v802 = vrot.slane %v801, 4
          %v803 = vadd.f32 %v801, %v802
          %v804 = vrot.slane %v803, 2
          %v805 = vadd.f32 %v803, %v804
          %v806 = vrot.slane %v805, 1
          %v807 = vadd.f32 %v805, %v806
          %v808 = vmul.f32 %v807, %v789
          %v809 = vadd.f32 %v808, 1e-05
          %v810 = vrsqrt.pop %v809
          %v811 = vmul.f32 %v791, %v810
          %v812 = vmul.f32 %v792, %v810
          %v813 = vmul.f32 %v793, %v810
          %v814 = vmul.f32 %v794, %v810
          %v815 = vlaneseq
          %v816 = vshrl.u32 %v815, 7
          %v817 = vsub.s32 0, %v816
          %v818 = vrot.slane %v775, %v817
          %v819 = vmul.f32 %v811, %v818
          %v820 = vmul.f32 %v812, %v818
          %v821 = vmul.f32 %v813, %v818
          %v822 = vmul.f32 %v814, %v818
          %v823 = vlaneseq
          %v824 = vshrl.u32 %v823, 7
          %v825 = vsub.s32 1, %v824
          %v826 = vrot.slane %v775, %v825
          %v827 = vadd.f32 %v819, %v826
          %v828 = vadd.f32 %v820, %v826
          %v829 = vadd.f32 %v821, %v826
          %v830 = vadd.f32 %v822, %v826
          %v831 = vld [vmem:[#allocation3] sm:$0xff]
          %v832 = vld [vmem:[#allocation3 + $0x8] sm:$0xff]
          %v833 = vld [vmem:[#allocation3 + $0x10] sm:$0xff]
          %v834 = vld [vmem:[#allocation3 + $0x18] sm:$0xff]
          %v835 = vadd.f32 %v827, %v831
          %v836 = vadd.f32 %v828, %v832
          %v837 = vadd.f32 %v829, %v833
          %v838 = vadd.f32 %v830, %v834
          %v839 = vmul.f32 %v835, 0.5
          %v840 = vmul.f32 %v836, 0.5
          %v841 = vmul.f32 %v837, 0.5
          %v842 = vmul.f32 %v838, 0.5
          %v843 = vmul.f32 %v835, 0.70710677
          %v844 = vmul.f32 %v836, 0.70710677
          %v845 = vmul.f32 %v837, 0.70710677
          %v846 = vmul.f32 %v838, 0.70710677
          %v847 = verf.f32.pop %v843
          %v848 = verf.f32.pop %v844
          %v849 = verf.f32.pop %v845
          %v850 = verf.f32.pop %v846
          %v851 = vadd.f32 %v847, 1.0
          %v852 = vadd.f32 %v848, 1.0
          %v853 = vadd.f32 %v849, 1.0
          %v854 = vadd.f32 %v850, 1.0
          %v855 = vmul.f32 %v839, %v851
          %v856 = vmul.f32 %v840, %v852
          %v857 = vmul.f32 %v841, %v853
          %v858 = vmul.f32 %v842, %v854
          %859 = vst [vmem:[%s526] sm:$0xff] %v855
          %860 = vst [vmem:[%s526 + $0x8] sm:$0xff] %v856
          %861 = vst [vmem:[%s526 + $0x10] sm:$0xff] %v857
          %862 = vst [vmem:[%s526 + $0x18] sm:$0xff] %v858
        $region162: #{residual_block.3} parent=141 // pred_fallthru
          _
        %s863 = sand.u32 %s166, 1
        %s864 = scalar_lea.sflag [#allocation8], %s863
        %s865 = sand.u32 %s166, 1
        %s866 = smul.addr %s865, 32
        %s867 = scalar_lea.vmem [#allocation7], %s866
        // Predicated region
        $region163: #{residual_block.3} parent=141 // pred_check
          %p868 = pneg %p176
        $region164: #{residual_block.3} parent=141 // pred_check_branch
          %870 = sbr.rel (%p868) target = $region166
        $region165: #{residual_block.3} parent=141 // pred_region
          %s872 = ssub.s32 512, 512
          %873 = vsyncadd %s864, %s872
          %s874 = smul.addr %s23, 128
          %s875 = scalar_lea.hbm %s5, %s874
          %s876 = sshll.u32 %s867, 4
          %s877 = int_to_ptr.vmem [resolvable:$true] %s876
          %882 = dma.vmem_to_hbm [thread:$0]  %s877, 512, %s875, %s864, 128, 256, 8
        $region166: #{residual_block.3} parent=141 // pred_fallthru
          _
      $region142: #{residual_block.3} parent=5 // pred_fallthru
        _
      %p883 = scmp.le.s32.totalorder 2, %s14
      // Predicated region
      $region167: #{residual_block.3} parent=5 // pred_check
        %p884 = pneg %p883
      $region168: #{residual_block.3} parent=5 // pred_check_branch
        %886 = sbr.rel (%p884) target = $region170
      $region169: #{residual_block.3} parent=5 // pred_region
        %s887 = ssub.s32 %s14, 2
        // Predicated region
        $region171: #{residual_block.3} parent=169 // pred_check
          %p888 = pneg %p182
        $region172: #{residual_block.3} parent=169 // pred_check_branch
          %890 = sbr.rel (%p888) target = $region174
        $region173: #{residual_block.3} parent=169 // pred_region
          %s891 = sand.u32 %s167, 1
          %s892 = scalar_lea.sflag [#allocation8], %s891
          %s893 = sand.u32 %s167, 1
          %s894 = smul.addr %s893, 32
          %s895 = scalar_lea.vmem [#allocation7], %s894
          %896 = dma.done %s892, 512
        $region174: #{residual_block.3} parent=169 // pred_fallthru
          _
      $region170: #{residual_block.3} parent=5 // pred_fallthru
        _
    $region6: #{residual_block.3} parent=1 // loop_footer
      %s18 = sadd.s32 1, %s14
    $region7: #{residual_block.3} parent=1 // loop_footer_branch
      %13 = sbr.rel target = $region3
    $region8: #{residual_block.3} parent=1 // loop_exit
      _
    %897 = vsyncpa [#allocation8], 1
    %s898 = scalar_lea.sflag [#allocation8], 1
    %899 = vsyncpa %s898, 1

</llo_original>
